<compile_context>
chip_gen: v7x
topology: tpu7x:2x2x1
jax: 0.10.0
libtpu: 0.0.40
codegen_flags: <defaults>
</compile_context>

<pallas_src>
import functools

import jax
import jax.numpy as jnp
from jax import lax
from jax.experimental import pallas as pl
from jax.experimental.pallas import tpu as pltpu


# ---------------- kernel 1: fused input-gate projection (both directions) ----------------
# Columns of xg: [f_r | f_z | f_n | b_r | b_z | b_n], each He wide.
def _gates_kernel(src_ref, wih_ref, b_ref, xg_ref):
    acc = jnp.dot(src_ref[...].astype(jnp.bfloat16),
                  wih_ref[...].astype(jnp.bfloat16),
                  preferred_element_type=jnp.float32)
    xg_ref[...] = (acc + b_ref[...]).astype(xg_ref.dtype)


# -------- kernel 2: fused bidirectional GRU recurrence + tanh(fc(.)) head --------
def _bigru_kernel(xg_ref, whh_ref, bhn_ref, fcw_ref, fcb_ref,
                  out_ref, hid_ref, *, seq_len, hid, batch, unroll):
    S, H, N = seq_len, hid, batch

    # Loop-invariant loads / broadcasts hoisted out of the time loop.
    whh_f = whh_ref[0].astype(jnp.bfloat16)            # (H, 3H)
    whh_b = whh_ref[1].astype(jnp.bfloat16)            # (H, 3H)
    bhn_f = jnp.broadcast_to(bhn_ref[0], (N, H))       # n-gate hidden bias, fwd
    bhn_b = jnp.broadcast_to(bhn_ref[1], (N, H))       # n-gate hidden bias, bwd

    # Defined initial contents for the read-modify-write row stores below.
    out_ref[...] = jnp.zeros_like(out_ref)

    def one_step(t, h_f, h_b):
        t_rev = S - 1 - t
        xf = xg_ref[t].astype(jnp.float32)             # (N, 6H): fwd uses cols [0:3H)
        xb = xg_ref[t_rev].astype(jnp.float32)         # (N, 6H): bwd uses cols [3H:6H)

        hg_f = jnp.dot(h_f.astype(jnp.bfloat16), whh_f,
                       preferred_element_type=jnp.float32)       # (N, 3H)
        hg_b = jnp.dot(h_b.astype(jnp.bfloat16), whh_b,
                       preferred_element_type=jnp.float32)       # (N, 3H)

        # PyTorch GRU, gate order (r, z, n); b_ih and b_hh(r,z) already folded into xg.
        r_f = jax.nn.sigmoid(xf[:, 0:H] + hg_f[:, 0:H])
        z_f = jax.nn.sigmoid(xf[:, H:2 * H] + hg_f[:, H:2 * H])
        n_f = jnp.tanh(xf[:, 2 * H:3 * H] + r_f * (hg_f[:, 2 * H:3 * H] + bhn_f))
        h_f = (1.0 - z_f) * n_f + z_f * h_f

        r_b = jax.nn.sigmoid(xb[:, 3 * H:4 * H] + hg_b[:, 0:H])
        z_b = jax.nn.sigmoid(xb[:, 4 * H:5 * H] + hg_b[:, H:2 * H])
        n_b = jnp.tanh(xb[:, 5 * H:6 * H] + r_b * (hg_b[:, 2 * H:3 * H] + bhn_b))
        h_b = (1.0 - z_b) * n_b + z_b * h_b

        # Write straight into the concatenated (S, N, 2H) layout.  Each source-time
        # row is touched once per direction; read-modify-write keeps every store a
        # full lane-dense row and off the h->h recurrence critical path.
        row_f = out_ref[t]
        out_ref[t] = jnp.concatenate([h_f, row_f[:, H:]], axis=-1)
        row_b = out_ref[t_rev]
        out_ref[t_rev] = jnp.concatenate([row_b[:, :H], h_b], axis=-1)
        return h_f, h_b

    def chunk(c, carry):
        h_f, h_b = carry
        for u in range(unroll):                        # static unroll within fori_loop
            h_f, h_b = one_step(c * unroll + u, h_f, h_b)
        return h_f, h_b

    h0 = jnp.zeros((N, H), jnp.float32)
    h_f, h_b = lax.fori_loop(0, S // unroll, chunk, (h0, h0))
    for t in range(S - S % unroll, S):                 # remainder (empty if unroll | S)
        h_f, h_b = one_step(t, h_f, h_b)

    # hidden = tanh(cat(h_fwd_last, h_bwd_last) @ fc_w + fc_b), fused here
    # (no third pallas_call, no hcat HBM round trip).
    fcw = fcw_ref[...]                                 # (2H, Hd)
    hid_ref[...] = jnp.tanh(
        jnp.dot(h_f, fcw[:H, :], preferred_element_type=jnp.float32)
        + jnp.dot(h_b, fcw[H:, :], preferred_element_type=jnp.float32)
        + fcb_ref[...])


# --------------------------------- parameters ---------------------------------
def init_params(key, *, emb_dim, enc_hid_dim, dec_hid_dim):
    E, He, Hd = emb_dim, enc_hid_dim, dec_hid_dim
    shapes = {
        # direction-stacked GRU weights, transposed vs PyTorch; gate columns (r, z, n)
        "wih": (2, E, 3 * He),
        "bih": (2, 3 * He),
        "whh": (2, He, 3 * He),
        "bhh": (2, 3 * He),
        "fc_w": (2 * He, Hd),
        "fc_b": (Hd,),
    }
    keys = jax.random.split(key, len(shapes))
    return {name: 0.1 * jax.random.normal(k, shp, jnp.float32)
            for (name, shp), k in zip(shapes.items(), keys)}


# --------------------------------- forward pass ---------------------------------
def encoder_forward(params, src):
    """src: (S, N, E) float32.  Returns (outputs (S, N, 2*He), hidden (N, Hd))."""
    S, N, E = src.shape
    He = params["whh"].shape[-1] // 3
    Hd = params["fc_w"].shape[1]
    SN = S * N

    # Dropout is identity in eval mode.
    src_flat = src.reshape(SN, E)

    # ---- tiny weight-sized repacking (negligible vs. activation traffic) ----
    wih_cat = jnp.concatenate([params["wih"][0], params["wih"][1]], axis=1)   # (E, 6He)
    bhh_rz = params["bhh"].at[:, 2 * He:].set(0.0)          # keep b_hn out of the fold
    b_fold = (params["bih"] + bhh_rz).reshape(1, 6 * He)    # b_ih + b_hh(r,z)
    bhn = params["bhh"][:, 2 * He:].reshape(2, 1, He)       # b_hn per direction
    fcb = params["fc_b"].reshape(1, Hd)

    # 1) Input-gate projection for BOTH directions in one matmul, row-tiled grid.
    TM = SN if SN <= 512 else 256
    xg = pl.pallas_call(
        _gates_kernel,
        out_shape=jax.ShapeDtypeStruct((SN, 6 * He), jnp.bfloat16),
        grid=(pl.cdiv(SN, TM),),
        in_specs=[
            pl.BlockSpec((TM, E), lambda i: (i, 0)),
            pl.BlockSpec((E, 6 * He), lambda i: (0, 0)),
            pl.BlockSpec((1, 6 * He), lambda i: (0, 0)),
        ],
        out_specs=pl.BlockSpec((TM, 6 * He), lambda i: (i, 0)),
        compiler_params=pltpu.CompilerParams(dimension_semantics=("parallel",)),
    )(src_flat, wih_cat, b_fold)
    xg = xg.reshape(S, N, 6 * He)          # contiguous reshape (free)

    # 2) Fused bidirectional GRU recurrence + tanh(fc(.)) head, one launch.
    unroll = next(u for u in (4, 2, 1) if S % u == 0)
    outputs, hidden = pl.pallas_call(
        functools.partial(_bigru_kernel, seq_len=S, hid=He, batch=N, unroll=unroll),
        out_shape=(jax.ShapeDtypeStruct((S, N, 2 * He), jnp.float32),
                   jax.ShapeDtypeStruct((N, Hd), jnp.float32)),
        grid=(1,),
        in_specs=[
            pl.BlockSpec((S, N, 6 * He), lambda i: (0, 0, 0)),
            pl.BlockSpec((2, He, 3 * He), lambda i: (0, 0, 0)),
            pl.BlockSpec((2, 1, He), lambda i: (0, 0, 0)),
            pl.BlockSpec((2 * He, Hd), lambda i: (0, 0)),
            pl.BlockSpec((1, Hd), lambda i: (0, 0)),
        ],
        out_specs=(pl.BlockSpec((S, N, 2 * He), lambda i: (0, 0, 0)),
                   pl.BlockSpec((N, Hd), lambda i: (0, 0))),
        compiler_params=pltpu.CompilerParams(dimension_semantics=("arbitrary",)),
    )(xg, params["whh"], bhn, params["fc_w"], fcb)

    return outputs, hidden


if __name__ == "__main__":
    key = jax.random.PRNGKey(0)
    S, N = 16, 2          # src_len, batch_size
    E = 32                # emb_dim (img_channel)
    He, Hd = 32, 32       # enc_hid_dim, dec_hid_dim

    k_src, k_par = jax.random.split(key)
    src = jax.random.normal(k_src, (S, N, E), jnp.float32)
    params = init_params(k_par, emb_dim=E, enc_hid_dim=He, dec_hid_dim=Hd)

    outputs, hidden = jax.jit(encoder_forward)(params, src)
    jax.block_until_ready((outputs, hidden))

    assert outputs.shape == (S, N, 2 * He), outputs.shape
    assert hidden.shape == (N, Hd), hidden.shape
    assert bool(jnp.all(jnp.isfinite(outputs)))
    assert bool(jnp.all(jnp.isfinite(hidden)))
    print("KERNEL_OK")
</pallas_src>

<mosaic_0001>
module attributes {stable_mosaic.version = 11 : i64} {
  func.func @_gates_kernel(%arg0: i32, %arg1: memref<32x32xf32, #tpu.memory_space<vmem>>, %arg2: memref<32x192xf32, #tpu.memory_space<vmem>>, %arg3: memref<1x192xf32, #tpu.memory_space<vmem>>, %arg4: memref<32x192xbf16, #tpu.memory_space<vmem>>) attributes {dimension_semantics = [#tpu.dimension_semantics<parallel>], iteration_bounds = array<i64: 1>, scalar_prefetch = 0 : i64, scratch_operands = 0 : i64, tpu.core_type = #tpu.core_type<tc>, window_params = [{transform_indices = @transform_0, window_bounds = array<i64: 32, 32>}, {pipeline_mode = #tpu.pipeline_mode<synchronous>, transform_indices = @transform_1, window_bounds = array<i64: 32, 192>}, {pipeline_mode = #tpu.pipeline_mode<synchronous>, transform_indices = @transform_2, window_bounds = array<i64: 1, 192>}, {transform_indices = @transform_3, window_bounds = array<i64: 32, 192>}]} {
    %c0 = arith.constant 0 : index
    %c0_0 = arith.constant 0 : index
    %0 = vector.load %arg1[%c0, %c0_0] : memref<32x32xf32, #tpu.memory_space<vmem>>, vector<32x32xf32>
    %1 = arith.truncf %0 : vector<32x32xf32> to vector<32x32xbf16>
    %c0_1 = arith.constant 0 : index
    %c0_2 = arith.constant 0 : index
    %2 = vector.load %arg2[%c0_1, %c0_2] : memref<32x192xf32, #tpu.memory_space<vmem>>, vector<32x192xf32>
    %3 = arith.truncf %2 : vector<32x192xf32> to vector<32x192xbf16>
    %cst = arith.constant dense<0.000000e+00> : vector<32x192xf32>
    %4 = tpu.matmul %1, %3, %cst {dimension_numbers = #tpu.dot_dimension_numbers<[1], [0], [0], [1], [0, 0, 1, 1], [], []>} : vector<32x32xbf16>, vector<32x192xbf16>, vector<32x192xf32> -> vector<32x192xf32>
    %c0_3 = arith.constant 0 : index
    %c0_4 = arith.constant 0 : index
    %5 = vector.load %arg3[%c0_3, %c0_4] : memref<1x192xf32, #tpu.memory_space<vmem>>, vector<1x192xf32>
    %6 = vector.broadcast %5 : vector<1x192xf32> to vector<32x192xf32>
    %7 = arith.addf %4, %6 : vector<32x192xf32>
    %8 = arith.truncf %7 : vector<32x192xf32> to vector<32x192xbf16>
    %c0_5 = arith.constant 0 : index
    %c0_6 = arith.constant 0 : index
    %9 = vector.load %arg4[%c0_5, %c0_6] : memref<32x192xbf16, #tpu.memory_space<vmem>>, vector<32x192xbf16>
    tpu.vector_store %arg4[%c0_5, %c0_6], %8 {strides = array<i32>} : memref<32x192xbf16, #tpu.memory_space<vmem>>, vector<32x192xbf16>,
    return
  }
  func.func @transform_0(%arg0: i32) -> (i32, i32) {
    %c0_i32 = arith.constant 0 : i32
    %c0_i32_0 = arith.constant 0 : i32
    return %arg0, %c0_i32 : i32, i32
  }
  func.func @transform_1(%arg0: i32) -> (i32, i32) {
    %c0_i32 = arith.constant 0 : i32
    %c0_i32_0 = arith.constant 0 : i32
    %c0_i32_1 = arith.constant 0 : i32
    return %c0_i32, %c0_i32_0 : i32, i32
  }
  func.func @transform_2(%arg0: i32) -> (i32, i32) {
    %c0_i32 = arith.constant 0 : i32
    %c0_i32_0 = arith.constant 0 : i32
    %c0_i32_1 = arith.constant 0 : i32
    return %c0_i32, %c0_i32_0 : i32, i32
  }
  func.func @transform_3(%arg0: i32) -> (i32, i32) {
    %c0_i32 = arith.constant 0 : i32
    %c0_i32_0 = arith.constant 0 : i32
    return %arg0, %c0_i32 : i32, i32
  }
}

module attributes {stable_mosaic.version = 11 : i64} {
  func.func @_bigru_kernel(%arg0: i32, %arg1: memref<16x2x192xbf16, #tpu.memory_space<vmem>>, %arg2: memref<2x32x96xf32, #tpu.memory_space<vmem>>, %arg3: memref<2x1x32xf32, #tpu.memory_space<vmem>>, %arg4: memref<64x32xf32, #tpu.memory_space<vmem>>, %arg5: memref<1x32xf32, #tpu.memory_space<vmem>>, %arg6: memref<16x2x64xf32, #tpu.memory_space<vmem>>, %arg7: memref<2x32xf32, #tpu.memory_space<vmem>>) attributes {dimension_semantics = [#tpu.dimension_semantics<arbitrary>], iteration_bounds = array<i64: 1>, scalar_prefetch = 0 : i64, scratch_operands = 0 : i64, tpu.core_type = #tpu.core_type<tc>, window_params = [{pipeline_mode = #tpu.pipeline_mode<synchronous>, transform_indices = @transform_0, window_bounds = array<i64: 16, 2, 192>}, {pipeline_mode = #tpu.pipeline_mode<synchronous>, transform_indices = @transform_1, window_bounds = array<i64: 2, 32, 96>}, {pipeline_mode = #tpu.pipeline_mode<synchronous>, transform_indices = @transform_2, window_bounds = array<i64: 2, 1, 32>}, {pipeline_mode = #tpu.pipeline_mode<synchronous>, transform_indices = @transform_3, window_bounds = array<i64: 64, 32>}, {pipeline_mode = #tpu.pipeline_mode<synchronous>, transform_indices = @transform_4, window_bounds = array<i64: 1, 32>}, {pipeline_mode = #tpu.pipeline_mode<synchronous>, transform_indices = @transform_5, window_bounds = array<i64: 16, 2, 64>}, {pipeline_mode = #tpu.pipeline_mode<synchronous>, transform_indices = @transform_6, window_bounds = array<i64: 2, 32>}]} {
    %c0 = arith.constant 0 : index
    %c0_0 = arith.constant 0 : index
    %c0_1 = arith.constant 0 : index
    %0 = vector.load %arg2[%c0, %c0_0, %c0_1] : memref<2x32x96xf32, #tpu.memory_space<vmem>>, vector<1x32x96xf32>
    %1 = vector.shape_cast %0 : vector<1x32x96xf32> to vector<32x96xf32>
    %2 = arith.truncf %1 : vector<32x96xf32> to vector<32x96xbf16>
    %c1 = arith.constant 1 : index
    %c0_2 = arith.constant 0 : index
    %c0_3 = arith.constant 0 : index
    %3 = vector.load %arg2[%c1, %c0_2, %c0_3] : memref<2x32x96xf32, #tpu.memory_space<vmem>>, vector<1x32x96xf32>
    %4 = vector.shape_cast %3 : vector<1x32x96xf32> to vector<32x96xf32>
    %5 = arith.truncf %4 : vector<32x96xf32> to vector<32x96xbf16>
    %c0_4 = arith.constant 0 : index
    %c0_5 = arith.constant 0 : index
    %c0_6 = arith.constant 0 : index
    %6 = vector.load %arg3[%c0_4, %c0_5, %c0_6] : memref<2x1x32xf32, #tpu.memory_space<vmem>>, vector<1x1x32xf32>
    %7 = vector.shape_cast %6 : vector<1x1x32xf32> to vector<1x32xf32>
    %8 = vector.shape_cast %7 : vector<1x32xf32> to vector<1x32xf32>
    %9 = vector.broadcast %8 : vector<1x32xf32> to vector<2x32xf32>
    %c1_7 = arith.constant 1 : index
    %c0_8 = arith.constant 0 : index
    %c0_9 = arith.constant 0 : index
    %10 = vector.load %arg3[%c1_7, %c0_8, %c0_9] : memref<2x1x32xf32, #tpu.memory_space<vmem>>, vector<1x1x32xf32>
    %11 = vector.shape_cast %10 : vector<1x1x32xf32> to vector<1x32xf32>
    %12 = vector.shape_cast %11 : vector<1x32xf32> to vector<1x32xf32>
    %13 = vector.broadcast %12 : vector<1x32xf32> to vector<2x32xf32>
    %cst = arith.constant 0.000000e+00 : f32
    %14 = vector.broadcast %cst : f32 to vector<16x2x64xf32>
    %c0_10 = arith.constant 0 : index
    %c0_11 = arith.constant 0 : index
    %c0_12 = arith.constant 0 : index
    %15 = vector.load %arg6[%c0_10, %c0_11, %c0_12] : memref<16x2x64xf32, #tpu.memory_space<vmem>>, vector<16x2x64xf32>
    tpu.vector_store %arg6[%c0_10, %c0_11, %c0_12], %14 {strides = array<i32>} : memref<16x2x64xf32, #tpu.memory_space<vmem>>, vector<16x2x64xf32>,
    %cst_13 = arith.constant 0.000000e+00 : f32
    %16 = vector.broadcast %cst_13 : f32 to vector<2x32xf32>
    %c0_i32 = arith.constant 0 : i32
    %c4_i32 = arith.constant 4 : i32
    %17 = arith.addi %c0_i32, %c4_i32 : i32
    %c1_i32 = arith.constant 1 : i32
    %18:2 = scf.for %arg8 = %c0_i32 to %17 step %c1_i32 iter_args(%arg9 = %16, %arg10 = %16) -> (vector<2x32xf32>, vector<2x32xf32>)  : i32 {
      %c4_i32_23 = arith.constant 4 : i32
      %30 = arith.muli %arg8, %c4_i32_23 : i32
      %c0_i32_24 = arith.constant 0 : i32
      %31 = arith.addi %30, %c0_i32_24 : i32
      %c15_i32 = arith.constant 15 : i32
      %32 = arith.subi %c15_i32, %31 : i32
      %33 = arith.index_cast %31 : i32 to index
      %c0_25 = arith.constant 0 : index
      %c0_26 = arith.constant 0 : index
      %34 = vector.load %arg1[%33, %c0_25, %c0_26] : memref<16x2x192xbf16, #tpu.memory_space<vmem>>, vector<1x2x192xbf16>
      %35 = vector.shape_cast %34 : vector<1x2x192xbf16> to vector<2x192xbf16>
      %36 = arith.extf %35 : vector<2x192xbf16> to vector<2x192xf32>
      %37 = arith.index_cast %32 : i32 to index
      %c0_27 = arith.constant 0 : index
      %c0_28 = arith.constant 0 : index
      %38 = vector.load %arg1[%37, %c0_27, %c0_28] : memref<16x2x192xbf16, #tpu.memory_space<vmem>>, vector<1x2x192xbf16>
      %39 = vector.shape_cast %38 : vector<1x2x192xbf16> to vector<2x192xbf16>
      %40 = arith.extf %39 : vector<2x192xbf16> to vector<2x192xf32>
      %41 = arith.truncf %arg9 : vector<2x32xf32> to vector<2x32xbf16>
      %cst_29 = arith.constant dense<0.000000e+00> : vector<2x96xf32>
      %42 = tpu.matmul %41, %2, %cst_29 {dimension_numbers = #tpu.dot_dimension_numbers<[1], [0], [0], [1], [0, 0, 1, 1], [], []>} : vector<2x32xbf16>, vector<32x96xbf16>, vector<2x96xf32> -> vector<2x96xf32>
      %43 = arith.truncf %arg10 : vector<2x32xf32> to vector<2x32xbf16>
      %cst_30 = arith.constant dense<0.000000e+00> : vector<2x96xf32>
      %44 = tpu.matmul %43, %5, %cst_30 {dimension_numbers = #tpu.dot_dimension_numbers<[1], [0], [0], [1], [0, 0, 1, 1], [], []>} : vector<2x32xbf16>, vector<32x96xbf16>, vector<2x96xf32> -> vector<2x96xf32>
      %45 = vector.extract_strided_slice %36 {offsets = [0, 0], sizes = [2, 32], strides = [1, 1]} : vector<2x192xf32> to vector<2x32xf32>
      %46 = vector.extract_strided_slice %42 {offsets = [0, 0], sizes = [2, 32], strides = [1, 1]} : vector<2x96xf32> to vector<2x32xf32>
      %47 = arith.addf %45, %46 : vector<2x32xf32>
      %48 = arith.negf %47 : vector<2x32xf32>
      %49 = math.exp %48 : vector<2x32xf32>
      %cst_31 = arith.constant 1.000000e+00 : f32
      %50 = vector.broadcast %cst_31 : f32 to vector<2x32xf32>
      %51 = arith.addf %50, %49 : vector<2x32xf32>
      %52 = arith.divf %50, %51 : vector<2x32xf32>
      %53 = vector.extract_strided_slice %36 {offsets = [0, 32], sizes = [2, 32], strides = [1, 1]} : vector<2x192xf32> to vector<2x32xf32>
      %54 = vector.extract_strided_slice %42 {offsets = [0, 32], sizes = [2, 32], strides = [1, 1]} : vector<2x96xf32> to vector<2x32xf32>
      %55 = arith.addf %53, %54 : vector<2x32xf32>
      %56 = arith.negf %55 : vector<2x32xf32>
      %57 = math.exp %56 : vector<2x32xf32>
      %cst_32 = arith.constant 1.000000e+00 : f32
      %58 = vector.broadcast %cst_32 : f32 to vector<2x32xf32>
      %59 = arith.addf %58, %57 : vector<2x32xf32>
      %60 = arith.divf %58, %59 : vector<2x32xf32>
      %61 = vector.extract_strided_slice %36 {offsets = [0, 64], sizes = [2, 32], strides = [1, 1]} : vector<2x192xf32> to vector<2x32xf32>
      %62 = vector.extract_strided_slice %42 {offsets = [0, 64], sizes = [2, 32], strides = [1, 1]} : vector<2x96xf32> to vector<2x32xf32>
      %63 = arith.addf %62, %9 : vector<2x32xf32>
      %64 = arith.mulf %52, %63 : vector<2x32xf32>
      %65 = arith.addf %61, %64 : vector<2x32xf32>
      %66 = math.tanh %65 : vector<2x32xf32>
      %cst_33 = arith.constant 1.000000e+00 : f32
      %67 = vector.broadcast %cst_33 : f32 to vector<2x32xf32>
      %68 = arith.subf %67, %60 : vector<2x32xf32>
      %69 = arith.mulf %68, %66 : vector<2x32xf32>
      %70 = arith.mulf %60, %arg9 : vector<2x32xf32>
      %71 = arith.addf %69, %70 : vector<2x32xf32>
      %72 = vector.extract_strided_slice %40 {offsets = [0, 96], sizes = [2, 32], strides = [1, 1]} : vector<2x192xf32> to vector<2x32xf32>
      %73 = vector.extract_strided_slice %44 {offsets = [0, 0], sizes = [2, 32], strides = [1, 1]} : vector<2x96xf32> to vector<2x32xf32>
      %74 = arith.addf %72, %73 : vector<2x32xf32>
      %75 = arith.negf %74 : vector<2x32xf32>
      %76 = math.exp %75 : vector<2x32xf32>
      %cst_34 = arith.constant 1.000000e+00 : f32
      %77 = vector.broadcast %cst_34 : f32 to vector<2x32xf32>
      %78 = arith.addf %77, %76 : vector<2x32xf32>
      %79 = arith.divf %77, %78 : vector<2x32xf32>
      %80 = vector.extract_strided_slice %40 {offsets = [0, 128], sizes = [2, 32], strides = [1, 1]} : vector<2x192xf32> to vector<2x32xf32>
      %81 = vector.extract_strided_slice %44 {offsets = [0, 32], sizes = [2, 32], strides = [1, 1]} : vector<2x96xf32> to vector<2x32xf32>
      %82 = arith.addf %80, %81 : vector<2x32xf32>
      %83 = arith.negf %82 : vector<2x32xf32>
      %84 = math.exp %83 : vector<2x32xf32>
      %cst_35 = arith.constant 1.000000e+00 : f32
      %85 = vector.broadcast %cst_35 : f32 to vector<2x32xf32>
      %86 = arith.addf %85, %84 : vector<2x32xf32>
      %87 = arith.divf %85, %86 : vector<2x32xf32>
      %88 = vector.extract_strided_slice %40 {offsets = [0, 160], sizes = [2, 32], strides = [1, 1]} : vector<2x192xf32> to vector<2x32xf32>
      %89 = vector.extract_strided_slice %44 {offsets = [0, 64], sizes = [2, 32], strides = [1, 1]} : vector<2x96xf32> to vector<2x32xf32>
      %90 = arith.addf %89, %13 : vector<2x32xf32>
      %91 = arith.mulf %79, %90 : vector<2x32xf32>
      %92 = arith.addf %88, %91 : vector<2x32xf32>
      %93 = math.tanh %92 : vector<2x32xf32>
      %cst_36 = arith.constant 1.000000e+00 : f32
      %94 = vector.broadcast %cst_36 : f32 to vector<2x32xf32>
      %95 = arith.subf %94, %87 : vector<2x32xf32>
      %96 = arith.mulf %95, %93 : vector<2x32xf32>
      %97 = arith.mulf %87, %arg10 : vector<2x32xf32>
      %98 = arith.addf %96, %97 : vector<2x32xf32>
      %99 = arith.index_cast %31 : i32 to index
      %c0_37 = arith.constant 0 : index
      %c0_38 = arith.constant 0 : index
      %100 = vector.load %arg6[%99, %c0_37, %c0_38] : memref<16x2x64xf32, #tpu.memory_space<vmem>>, vector<1x2x64xf32>
      %101 = vector.shape_cast %100 : vector<1x2x64xf32> to vector<2x64xf32>
      %102 = vector.extract_strided_slice %101 {offsets = [0, 32], sizes = [2, 32], strides = [1, 1]} : vector<2x64xf32> to vector<2x32xf32>
      %103 = tpu.concatenate %71, %102 in 1 : vector<2x32xf32>, vector<2x32xf32> -> vector<2x64xf32>
      %104 = arith.index_cast %31 : i32 to index
      %c0_39 = arith.constant 0 : index
      %c0_40 = arith.constant 0 : index
      %105 = vector.load %arg6[%104, %c0_39, %c0_40] : memref<16x2x64xf32, #tpu.memory_space<vmem>>, vector<1x2x64xf32>
      %106 = vector.shape_cast %105 : vector<1x2x64xf32> to vector<2x64xf32>
      %107 = vector.shape_cast %103 : vector<2x64xf32> to vector<1x2x64xf32>
      tpu.vector_store %arg6[%104, %c0_39, %c0_40], %107 {strides = array<i32>} : memref<16x2x64xf32, #tpu.memory_space<vmem>>, vector<1x2x64xf32>,
      %108 = arith.index_cast %32 : i32 to index
      %c0_41 = arith.constant 0 : index
      %c0_42 = arith.constant 0 : index
      %109 = vector.load %arg6[%108, %c0_41, %c0_42] : memref<16x2x64xf32, #tpu.memory_space<vmem>>, vector<1x2x64xf32>
      %110 = vector.shape_cast %109 : vector<1x2x64xf32> to vector<2x64xf32>
      %111 = vector.extract_strided_slice %110 {offsets = [0, 0], sizes = [2, 32], strides = [1, 1]} : vector<2x64xf32> to vector<2x32xf32>
      %112 = tpu.concatenate %111, %98 in 1 : vector<2x32xf32>, vector<2x32xf32> -> vector<2x64xf32>
      %113 = arith.index_cast %32 : i32 to index
      %c0_43 = arith.constant 0 : index
      %c0_44 = arith.constant 0 : index
      %114 = vector.load %arg6[%113, %c0_43, %c0_44] : memref<16x2x64xf32, #tpu.memory_space<vmem>>, vector<1x2x64xf32>
      %115 = vector.shape_cast %114 : vector<1x2x64xf32> to vector<2x64xf32>
      %116 = vector.shape_cast %112 : vector<2x64xf32> to vector<1x2x64xf32>
      tpu.vector_store %arg6[%113, %c0_43, %c0_44], %116 {strides = array<i32>} : memref<16x2x64xf32, #tpu.memory_space<vmem>>, vector<1x2x64xf32>,
      %c4_i32_45 = arith.constant 4 : i32
      %117 = arith.muli %arg8, %c4_i32_45 : i32
      %c1_i32_46 = arith.constant 1 : i32
      %118 = arith.addi %117, %c1_i32_46 : i32
      %c15_i32_47 = arith.constant 15 : i32
      %119 = arith.subi %c15_i32_47, %118 : i32
      %120 = arith.index_cast %118 : i32 to index
      %c0_48 = arith.constant 0 : index
      %c0_49 = arith.constant 0 : index
      %121 = vector.load %arg1[%120, %c0_48, %c0_49] : memref<16x2x192xbf16, #tpu.memory_space<vmem>>, vector<1x2x192xbf16>
      %122 = vector.shape_cast %121 : vector<1x2x192xbf16> to vector<2x192xbf16>
      %123 = arith.extf %122 : vector<2x192xbf16> to vector<2x192xf32>
      %124 = arith.index_cast %119 : i32 to index
      %c0_50 = arith.constant 0 : index
      %c0_51 = arith.constant 0 : index
      %125 = vector.load %arg1[%124, %c0_50, %c0_51] : memref<16x2x192xbf16, #tpu.memory_space<vmem>>, vector<1x2x192xbf16>
      %126 = vector.shape_cast %125 : vector<1x2x192xbf16> to vector<2x192xbf16>
      %127 = arith.extf %126 : vector<2x192xbf16> to vector<2x192xf32>
      %128 = arith.truncf %71 : vector<2x32xf32> to vector<2x32xbf16>
      %cst_52 = arith.constant dense<0.000000e+00> : vector<2x96xf32>
      %129 = tpu.matmul %128, %2, %cst_52 {dimension_numbers = #tpu.dot_dimension_numbers<[1], [0], [0], [1], [0, 0, 1, 1], [], []>} : vector<2x32xbf16>, vector<32x96xbf16>, vector<2x96xf32> -> vector<2x96xf32>
      %130 = arith.truncf %98 : vector<2x32xf32> to vector<2x32xbf16>
      %cst_53 = arith.constant dense<0.000000e+00> : vector<2x96xf32>
      %131 = tpu.matmul %130, %5, %cst_53 {dimension_numbers = #tpu.dot_dimension_numbers<[1], [0], [0], [1], [0, 0, 1, 1], [], []>} : vector<2x32xbf16>, vector<32x96xbf16>, vector<2x96xf32> -> vector<2x96xf32>
      %132 = vector.extract_strided_slice %123 {offsets = [0, 0], sizes = [2, 32], strides = [1, 1]} : vector<2x192xf32> to vector<2x32xf32>
      %133 = vector.extract_strided_slice %129 {offsets = [0, 0], sizes = [2, 32], strides = [1, 1]} : vector<2x96xf32> to vector<2x32xf32>
      %134 = arith.addf %132, %133 : vector<2x32xf32>
      %135 = arith.negf %134 : vector<2x32xf32>
      %136 = math.exp %135 : vector<2x32xf32>
      %cst_54 = arith.constant 1.000000e+00 : f32
      %137 = vector.broadcast %cst_54 : f32 to vector<2x32xf32>
      %138 = arith.addf %137, %136 : vector<2x32xf32>
      %139 = arith.divf %137, %138 : vector<2x32xf32>
      %140 = vector.extract_strided_slice %123 {offsets = [0, 32], sizes = [2, 32], strides = [1, 1]} : vector<2x192xf32> to vector<2x32xf32>
      %141 = vector.extract_strided_slice %129 {offsets = [0, 32], sizes = [2, 32], strides = [1, 1]} : vector<2x96xf32> to vector<2x32xf32>
      %142 = arith.addf %140, %141 : vector<2x32xf32>
      %143 = arith.negf %142 : vector<2x32xf32>
      %144 = math.exp %143 : vector<2x32xf32>
      %cst_55 = arith.constant 1.000000e+00 : f32
      %145 = vector.broadcast %cst_55 : f32 to vector<2x32xf32>
      %146 = arith.addf %145, %144 : vector<2x32xf32>
      %147 = arith.divf %145, %146 : vector<2x32xf32>
      %148 = vector.extract_strided_slice %123 {offsets = [0, 64], sizes = [2, 32], strides = [1, 1]} : vector<2x192xf32> to vector<2x32xf32>
      %149 = vector.extract_strided_slice %129 {offsets = [0, 64], sizes = [2, 32], strides = [1, 1]} : vector<2x96xf32> to vector<2x32xf32>
      %150 = arith.addf %149, %9 : vector<2x32xf32>
      %151 = arith.mulf %139, %150 : vector<2x32xf32>
      %152 = arith.addf %148, %151 : vector<2x32xf32>
      %153 = math.tanh %152 : vector<2x32xf32>
      %cst_56 = arith.constant 1.000000e+00 : f32
      %154 = vector.broadcast %cst_56 : f32 to vector<2x32xf32>
      %155 = arith.subf %154, %147 : vector<2x32xf32>
      %156 = arith.mulf %155, %153 : vector<2x32xf32>
      %157 = arith.mulf %147, %71 : vector<2x32xf32>
      %158 = arith.addf %156, %157 : vector<2x32xf32>
      %159 = vector.extract_strided_slice %127 {offsets = [0, 96], sizes = [2, 32], strides = [1, 1]} : vector<2x192xf32> to vector<2x32xf32>
      %160 = vector.extract_strided_slice %131 {offsets = [0, 0], sizes = [2, 32], strides = [1, 1]} : vector<2x96xf32> to vector<2x32xf32>
      %161 = arith.addf %159, %160 : vector<2x32xf32>
      %162 = arith.negf %161 : vector<2x32xf32>
      %163 = math.exp %162 : vector<2x32xf32>
      %cst_57 = arith.constant 1.000000e+00 : f32
      %164 = vector.broadcast %cst_57 : f32 to vector<2x32xf32>
      %165 = arith.addf %164, %163 : vector<2x32xf32>
      %166 = arith.divf %164, %165 : vector<2x32xf32>
      %167 = vector.extract_strided_slice %127 {offsets = [0, 128], sizes = [2, 32], strides = [1, 1]} : vector<2x192xf32> to vector<2x32xf32>
      %168 = vector.extract_strided_slice %131 {offsets = [0, 32], sizes = [2, 32], strides = [1, 1]} : vector<2x96xf32> to vector<2x32xf32>
      %169 = arith.addf %167, %168 : vector<2x32xf32>
      %170 = arith.negf %169 : vector<2x32xf32>
      %171 = math.exp %170 : vector<2x32xf32>
      %cst_58 = arith.constant 1.000000e+00 : f32
      %172 = vector.broadcast %cst_58 : f32 to vector<2x32xf32>
      %173 = arith.addf %172, %171 : vector<2x32xf32>
      %174 = arith.divf %172, %173 : vector<2x32xf32>
      %175 = vector.extract_strided_slice %127 {offsets = [0, 160], sizes = [2, 32], strides = [1, 1]} : vector<2x192xf32> to vector<2x32xf32>
      %176 = vector.extract_strided_slice %131 {offsets = [0, 64], sizes = [2, 32], strides = [1, 1]} : vector<2x96xf32> to vector<2x32xf32>
      %177 = arith.addf %176, %13 : vector<2x32xf32>
      %178 = arith.mulf %166, %177 : vector<2x32xf32>
      %179 = arith.addf %175, %178 : vector<2x32xf32>
      %180 = math.tanh %179 : vector<2x32xf32>
      %cst_59 = arith.constant 1.000000e+00 : f32
      %181 = vector.broadcast %cst_59 : f32 to vector<2x32xf32>
      %182 = arith.subf %181, %174 : vector<2x32xf32>
      %183 = arith.mulf %182, %180 : vector<2x32xf32>
      %184 = arith.mulf %174, %98 : vector<2x32xf32>
      %185 = arith.addf %183, %184 : vector<2x32xf32>
      %186 = arith.index_cast %118 : i32 to index
      %c0_60 = arith.constant 0 : index
      %c0_61 = arith.constant 0 : index
      %187 = vector.load %arg6[%186, %c0_60, %c0_61] : memref<16x2x64xf32, #tpu.memory_space<vmem>>, vector<1x2x64xf32>
      %188 = vector.shape_cast %187 : vector<1x2x64xf32> to vector<2x64xf32>
      %189 = vector.extract_strided_slice %188 {offsets = [0, 32], sizes = [2, 32], strides = [1, 1]} : vector<2x64xf32> to vector<2x32xf32>
      %190 = tpu.concatenate %158, %189 in 1 : vector<2x32xf32>, vector<2x32xf32> -> vector<2x64xf32>
      %191 = arith.index_cast %118 : i32 to index
      %c0_62 = arith.constant 0 : index
      %c0_63 = arith.constant 0 : index
      %192 = vector.load %arg6[%191, %c0_62, %c0_63] : memref<16x2x64xf32, #tpu.memory_space<vmem>>, vector<1x2x64xf32>
      %193 = vector.shape_cast %192 : vector<1x2x64xf32> to vector<2x64xf32>
      %194 = vector.shape_cast %190 : vector<2x64xf32> to vector<1x2x64xf32>
      tpu.vector_store %arg6[%191, %c0_62, %c0_63], %194 {strides = array<i32>} : memref<16x2x64xf32, #tpu.memory_space<vmem>>, vector<1x2x64xf32>,
      %195 = arith.index_cast %119 : i32 to index
      %c0_64 = arith.constant 0 : index
      %c0_65 = arith.constant 0 : index
      %196 = vector.load %arg6[%195, %c0_64, %c0_65] : memref<16x2x64xf32, #tpu.memory_space<vmem>>, vector<1x2x64xf32>
      %197 = vector.shape_cast %196 : vector<1x2x64xf32> to vector<2x64xf32>
      %198 = vector.extract_strided_slice %197 {offsets = [0, 0], sizes = [2, 32], strides = [1, 1]} : vector<2x64xf32> to vector<2x32xf32>
      %199 = tpu.concatenate %198, %185 in 1 : vector<2x32xf32>, vector<2x32xf32> -> vector<2x64xf32>
      %200 = arith.index_cast %119 : i32 to index
      %c0_66 = arith.constant 0 : index
      %c0_67 = arith.constant 0 : index
      %201 = vector.load %arg6[%200, %c0_66, %c0_67] : memref<16x2x64xf32, #tpu.memory_space<vmem>>, vector<1x2x64xf32>
      %202 = vector.shape_cast %201 : vector<1x2x64xf32> to vector<2x64xf32>
      %203 = vector.shape_cast %199 : vector<2x64xf32> to vector<1x2x64xf32>
      tpu.vector_store %arg6[%200, %c0_66, %c0_67], %203 {strides = array<i32>} : memref<16x2x64xf32, #tpu.memory_space<vmem>>, vector<1x2x64xf32>,
      %c4_i32_68 = arith.constant 4 : i32
      %204 = arith.muli %arg8, %c4_i32_68 : i32
      %c2_i32 = arith.constant 2 : i32
      %205 = arith.addi %204, %c2_i32 : i32
      %c15_i32_69 = arith.constant 15 : i32
      %206 = arith.subi %c15_i32_69, %205 : i32
      %207 = arith.index_cast %205 : i32 to index
      %c0_70 = arith.constant 0 : index
      %c0_71 = arith.constant 0 : index
      %208 = vector.load %arg1[%207, %c0_70, %c0_71] : memref<16x2x192xbf16, #tpu.memory_space<vmem>>, vector<1x2x192xbf16>
      %209 = vector.shape_cast %208 : vector<1x2x192xbf16> to vector<2x192xbf16>
      %210 = arith.extf %209 : vector<2x192xbf16> to vector<2x192xf32>
      %211 = arith.index_cast %206 : i32 to index
      %c0_72 = arith.constant 0 : index
      %c0_73 = arith.constant 0 : index
      %212 = vector.load %arg1[%211, %c0_72, %c0_73] : memref<16x2x192xbf16, #tpu.memory_space<vmem>>, vector<1x2x192xbf16>
      %213 = vector.shape_cast %212 : vector<1x2x192xbf16> to vector<2x192xbf16>
      %214 = arith.extf %213 : vector<2x192xbf16> to vector<2x192xf32>
      %215 = arith.truncf %158 : vector<2x32xf32> to vector<2x32xbf16>
      %cst_74 = arith.constant dense<0.000000e+00> : vector<2x96xf32>
      %216 = tpu.matmul %215, %2, %cst_74 {dimension_numbers = #tpu.dot_dimension_numbers<[1], [0], [0], [1], [0, 0, 1, 1], [], []>} : vector<2x32xbf16>, vector<32x96xbf16>, vector<2x96xf32> -> vector<2x96xf32>
      %217 = arith.truncf %185 : vector<2x32xf32> to vector<2x32xbf16>
      %cst_75 = arith.constant dense<0.000000e+00> : vector<2x96xf32>
      %218 = tpu.matmul %217, %5, %cst_75 {dimension_numbers = #tpu.dot_dimension_numbers<[1], [0], [0], [1], [0, 0, 1, 1], [], []>} : vector<2x32xbf16>, vector<32x96xbf16>, vector<2x96xf32> -> vector<2x96xf32>
      %219 = vector.extract_strided_slice %210 {offsets = [0, 0], sizes = [2, 32], strides = [1, 1]} : vector<2x192xf32> to vector<2x32xf32>
      %220 = vector.extract_strided_slice %216 {offsets = [0, 0], sizes = [2, 32], strides = [1, 1]} : vector<2x96xf32> to vector<2x32xf32>
      %221 = arith.addf %219, %220 : vector<2x32xf32>
      %222 = arith.negf %221 : vector<2x32xf32>
      %223 = math.exp %222 : vector<2x32xf32>
      %cst_76 = arith.constant 1.000000e+00 : f32
      %224 = vector.broadcast %cst_76 : f32 to vector<2x32xf32>
      %225 = arith.addf %224, %223 : vector<2x32xf32>
      %226 = arith.divf %224, %225 : vector<2x32xf32>
      %227 = vector.extract_strided_slice %210 {offsets = [0, 32], sizes = [2, 32], strides = [1, 1]} : vector<2x192xf32> to vector<2x32xf32>
      %228 = vector.extract_strided_slice %216 {offsets = [0, 32], sizes = [2, 32], strides = [1, 1]} : vector<2x96xf32> to vector<2x32xf32>
      %229 = arith.addf %227, %228 : vector<2x32xf32>
      %230 = arith.negf %229 : vector<2x32xf32>
      %231 = math.exp %230 : vector<2x32xf32>
      %cst_77 = arith.constant 1.000000e+00 : f32
      %232 = vector.broadcast %cst_77 : f32 to vector<2x32xf32>
      %233 = arith.addf %232, %231 : vector<2x32xf32>
      %234 = arith.divf %232, %233 : vector<2x32xf32>
      %235 = vector.extract_strided_slice %210 {offsets = [0, 64], sizes = [2, 32], strides = [1, 1]} : vector<2x192xf32> to vector<2x32xf32>
      %236 = vector.extract_strided_slice %216 {offsets = [0, 64], sizes = [2, 32], strides = [1, 1]} : vector<2x96xf32> to vector<2x32xf32>
      %237 = arith.addf %236, %9 : vector<2x32xf32>
      %238 = arith.mulf %226, %237 : vector<2x32xf32>
      %239 = arith.addf %235, %238 : vector<2x32xf32>
      %240 = math.tanh %239 : vector<2x32xf32>
      %cst_78 = arith.constant 1.000000e+00 : f32
      %241 = vector.broadcast %cst_78 : f32 to vector<2x32xf32>
      %242 = arith.subf %241, %234 : vector<2x32xf32>
      %243 = arith.mulf %242, %240 : vector<2x32xf32>
      %244 = arith.mulf %234, %158 : vector<2x32xf32>
      %245 = arith.addf %243, %244 : vector<2x32xf32>
      %246 = vector.extract_strided_slice %214 {offsets = [0, 96], sizes = [2, 32], strides = [1, 1]} : vector<2x192xf32> to vector<2x32xf32>
      %247 = vector.extract_strided_slice %218 {offsets = [0, 0], sizes = [2, 32], strides = [1, 1]} : vector<2x96xf32> to vector<2x32xf32>
      %248 = arith.addf %246, %247 : vector<2x32xf32>
      %249 = arith.negf %248 : vector<2x32xf32>
      %250 = math.exp %249 : vector<2x32xf32>
      %cst_79 = arith.constant 1.000000e+00 : f32
      %251 = vector.broadcast %cst_79 : f32 to vector<2x32xf32>
      %252 = arith.addf %251, %250 : vector<2x32xf32>
      %253 = arith.divf %251, %252 : vector<2x32xf32>
      %254 = vector.extract_strided_slice %214 {offsets = [0, 128], sizes = [2, 32], strides = [1, 1]} : vector<2x192xf32> to vector<2x32xf32>
      %255 = vector.extract_strided_slice %218 {offsets = [0, 32], sizes = [2, 32], strides = [1, 1]} : vector<2x96xf32> to vector<2x32xf32>
      %256 = arith.addf %254, %255 : vector<2x32xf32>
      %257 = arith.negf %256 : vector<2x32xf32>
      %258 = math.exp %257 : vector<2x32xf32>
      %cst_80 = arith.constant 1.000000e+00 : f32
      %259 = vector.broadcast %cst_80 : f32 to vector<2x32xf32>
      %260 = arith.addf %259, %258 : vector<2x32xf32>
      %261 = arith.divf %259, %260 : vector<2x32xf32>
      %262 = vector.extract_strided_slice %214 {offsets = [0, 160], sizes = [2, 32], strides = [1, 1]} : vector<2x192xf32> to vector<2x32xf32>
      %263 = vector.extract_strided_slice %218 {offsets = [0, 64], sizes = [2, 32], strides = [1, 1]} : vector<2x96xf32> to vector<2x32xf32>
      %264 = arith.addf %263, %13 : vector<2x32xf32>
      %265 = arith.mulf %253, %264 : vector<2x32xf32>
      %266 = arith.addf %262, %265 : vector<2x32xf32>
      %267 = math.tanh %266 : vector<2x32xf32>
      %cst_81 = arith.constant 1.000000e+00 : f32
      %268 = vector.broadcast %cst_81 : f32 to vector<2x32xf32>
      %269 = arith.subf %268, %261 : vector<2x32xf32>
      %270 = arith.mulf %269, %267 : vector<2x32xf32>
      %271 = arith.mulf %261, %185 : vector<2x32xf32>
      %272 = arith.addf %270, %271 : vector<2x32xf32>
      %273 = arith.index_cast %205 : i32 to index
      %c0_82 = arith.constant 0 : index
      %c0_83 = arith.constant 0 : index
      %274 = vector.load %arg6[%273, %c0_82, %c0_83] : memref<16x2x64xf32, #tpu.memory_space<vmem>>, vector<1x2x64xf32>
      %275 = vector.shape_cast %274 : vector<1x2x64xf32> to vector<2x64xf32>
      %276 = vector.extract_strided_slice %275 {offsets = [0, 32], sizes = [2, 32], strides = [1, 1]} : vector<2x64xf32> to vector<2x32xf32>
      %277 = tpu.concatenate %245, %276 in 1 : vector<2x32xf32>, vector<2x32xf32> -> vector<2x64xf32>
      %278 = arith.index_cast %205 : i32 to index
      %c0_84 = arith.constant 0 : index
      %c0_85 = arith.constant 0 : index
      %279 = vector.load %arg6[%278, %c0_84, %c0_85] : memref<16x2x64xf32, #tpu.memory_space<vmem>>, vector<1x2x64xf32>
      %280 = vector.shape_cast %279 : vector<1x2x64xf32> to vector<2x64xf32>
      %281 = vector.shape_cast %277 : vector<2x64xf32> to vector<1x2x64xf32>
      tpu.vector_store %arg6[%278, %c0_84, %c0_85], %281 {strides = array<i32>} : memref<16x2x64xf32, #tpu.memory_space<vmem>>, vector<1x2x64xf32>,
      %282 = arith.index_cast %206 : i32 to index
      %c0_86 = arith.constant 0 : index
      %c0_87 = arith.constant 0 : index
      %283 = vector.load %arg6[%282, %c0_86, %c0_87] : memref<16x2x64xf32, #tpu.memory_space<vmem>>, vector<1x2x64xf32>
      %284 = vector.shape_cast %283 : vector<1x2x64xf32> to vector<2x64xf32>
      %285 = vector.extract_strided_slice %284 {offsets = [0, 0], sizes = [2, 32], strides = [1, 1]} : vector<2x64xf32> to vector<2x32xf32>
      %286 = tpu.concatenate %285, %272 in 1 : vector<2x32xf32>, vector<2x32xf32> -> vector<2x64xf32>
      %287 = arith.index_cast %206 : i32 to index
      %c0_88 = arith.constant 0 : index
      %c0_89 = arith.constant 0 : index
      %288 = vector.load %arg6[%287, %c0_88, %c0_89] : memref<16x2x64xf32, #tpu.memory_space<vmem>>, vector<1x2x64xf32>
      %289 = vector.shape_cast %288 : vector<1x2x64xf32> to vector<2x64xf32>
      %290 = vector.shape_cast %286 : vector<2x64xf32> to vector<1x2x64xf32>
      tpu.vector_store %arg6[%287, %c0_88, %c0_89], %290 {strides = array<i32>} : memref<16x2x64xf32, #tpu.memory_space<vmem>>, vector<1x2x64xf32>,
      %c4_i32_90 = arith.constant 4 : i32
      %291 = arith.muli %arg8, %c4_i32_90 : i32
      %c3_i32 = arith.constant 3 : i32
      %292 = arith.addi %291, %c3_i32 : i32
      %c15_i32_91 = arith.constant 15 : i32
      %293 = arith.subi %c15_i32_91, %292 : i32
      %294 = arith.index_cast %292 : i32 to index
      %c0_92 = arith.constant 0 : index
      %c0_93 = arith.constant 0 : index
      %295 = vector.load %arg1[%294, %c0_92, %c0_93] : memref<16x2x192xbf16, #tpu.memory_space<vmem>>, vector<1x2x192xbf16>
      %296 = vector.shape_cast %295 : vector<1x2x192xbf16> to vector<2x192xbf16>
      %297 = arith.extf %296 : vector<2x192xbf16> to vector<2x192xf32>
      %298 = arith.index_cast %293 : i32 to index
      %c0_94 = arith.constant 0 : index
      %c0_95 = arith.constant 0 : index
      %299 = vector.load %arg1[%298, %c0_94, %c0_95] : memref<16x2x192xbf16, #tpu.memory_space<vmem>>, vector<1x2x192xbf16>
      %300 = vector.shape_cast %299 : vector<1x2x192xbf16> to vector<2x192xbf16>
      %301 = arith.extf %300 : vector<2x192xbf16> to vector<2x192xf32>
      %302 = arith.truncf %245 : vector<2x32xf32> to vector<2x32xbf16>
      %cst_96 = arith.constant dense<0.000000e+00> : vector<2x96xf32>
      %303 = tpu.matmul %302, %2, %cst_96 {dimension_numbers = #tpu.dot_dimension_numbers<[1], [0], [0], [1], [0, 0, 1, 1], [], []>} : vector<2x32xbf16>, vector<32x96xbf16>, vector<2x96xf32> -> vector<2x96xf32>
      %304 = arith.truncf %272 : vector<2x32xf32> to vector<2x32xbf16>
      %cst_97 = arith.constant dense<0.000000e+00> : vector<2x96xf32>
      %305 = tpu.matmul %304, %5, %cst_97 {dimension_numbers = #tpu.dot_dimension_numbers<[1], [0], [0], [1], [0, 0, 1, 1], [], []>} : vector<2x32xbf16>, vector<32x96xbf16>, vector<2x96xf32> -> vector<2x96xf32>
      %306 = vector.extract_strided_slice %297 {offsets = [0, 0], sizes = [2, 32], strides = [1, 1]} : vector<2x192xf32> to vector<2x32xf32>
      %307 = vector.extract_strided_slice %303 {offsets = [0, 0], sizes = [2, 32], strides = [1, 1]} : vector<2x96xf32> to vector<2x32xf32>
      %308 = arith.addf %306, %307 : vector<2x32xf32>
      %309 = arith.negf %308 : vector<2x32xf32>
      %310 = math.exp %309 : vector<2x32xf32>
      %cst_98 = arith.constant 1.000000e+00 : f32
      %311 = vector.broadcast %cst_98 : f32 to vector<2x32xf32>
      %312 = arith.addf %311, %310 : vector<2x32xf32>
      %313 = arith.divf %311, %312 : vector<2x32xf32>
      %314 = vector.extract_strided_slice %297 {offsets = [0, 32], sizes = [2, 32], strides = [1, 1]} : vector<2x192xf32> to vector<2x32xf32>
      %315 = vector.extract_strided_slice %303 {offsets = [0, 32], sizes = [2, 32], strides = [1, 1]} : vector<2x96xf32> to vector<2x32xf32>
      %316 = arith.addf %314, %315 : vector<2x32xf32>
      %317 = arith.negf %316 : vector<2x32xf32>
      %318 = math.exp %317 : vector<2x32xf32>
      %cst_99 = arith.constant 1.000000e+00 : f32
      %319 = vector.broadcast %cst_99 : f32 to vector<2x32xf32>
      %320 = arith.addf %319, %318 : vector<2x32xf32>
      %321 = arith.divf %319, %320 : vector<2x32xf32>
      %322 = vector.extract_strided_slice %297 {offsets = [0, 64], sizes = [2, 32], strides = [1, 1]} : vector<2x192xf32> to vector<2x32xf32>
      %323 = vector.extract_strided_slice %303 {offsets = [0, 64], sizes = [2, 32], strides = [1, 1]} : vector<2x96xf32> to vector<2x32xf32>
      %324 = arith.addf %323, %9 : vector<2x32xf32>
      %325 = arith.mulf %313, %324 : vector<2x32xf32>
      %326 = arith.addf %322, %325 : vector<2x32xf32>
      %327 = math.tanh %326 : vector<2x32xf32>
      %cst_100 = arith.constant 1.000000e+00 : f32
      %328 = vector.broadcast %cst_100 : f32 to vector<2x32xf32>
      %329 = arith.subf %328, %321 : vector<2x32xf32>
      %330 = arith.mulf %329, %327 : vector<2x32xf32>
      %331 = arith.mulf %321, %245 : vector<2x32xf32>
      %332 = arith.addf %330, %331 : vector<2x32xf32>
      %333 = vector.extract_strided_slice %301 {offsets = [0, 96], sizes = [2, 32], strides = [1, 1]} : vector<2x192xf32> to vector<2x32xf32>
      %334 = vector.extract_strided_slice %305 {offsets = [0, 0], sizes = [2, 32], strides = [1, 1]} : vector<2x96xf32> to vector<2x32xf32>
      %335 = arith.addf %333, %334 : vector<2x32xf32>
      %336 = arith.negf %335 : vector<2x32xf32>
      %337 = math.exp %336 : vector<2x32xf32>
      %cst_101 = arith.constant 1.000000e+00 : f32
      %338 = vector.broadcast %cst_101 : f32 to vector<2x32xf32>
      %339 = arith.addf %338, %337 : vector<2x32xf32>
      %340 = arith.divf %338, %339 : vector<2x32xf32>
      %341 = vector.extract_strided_slice %301 {offsets = [0, 128], sizes = [2, 32], strides = [1, 1]} : vector<2x192xf32> to vector<2x32xf32>
      %342 = vector.extract_strided_slice %305 {offsets = [0, 32], sizes = [2, 32], strides = [1, 1]} : vector<2x96xf32> to vector<2x32xf32>
      %343 = arith.addf %341, %342 : vector<2x32xf32>
      %344 = arith.negf %343 : vector<2x32xf32>
      %345 = math.exp %344 : vector<2x32xf32>
      %cst_102 = arith.constant 1.000000e+00 : f32
      %346 = vector.broadcast %cst_102 : f32 to vector<2x32xf32>
      %347 = arith.addf %346, %345 : vector<2x32xf32>
      %348 = arith.divf %346, %347 : vector<2x32xf32>
      %349 = vector.extract_strided_slice %301 {offsets = [0, 160], sizes = [2, 32], strides = [1, 1]} : vector<2x192xf32> to vector<2x32xf32>
      %350 = vector.extract_strided_slice %305 {offsets = [0, 64], sizes = [2, 32], strides = [1, 1]} : vector<2x96xf32> to vector<2x32xf32>
      %351 = arith.addf %350, %13 : vector<2x32xf32>
      %352 = arith.mulf %340, %351 : vector<2x32xf32>
      %353 = arith.addf %349, %352 : vector<2x32xf32>
      %354 = math.tanh %353 : vector<2x32xf32>
      %cst_103 = arith.constant 1.000000e+00 : f32
      %355 = vector.broadcast %cst_103 : f32 to vector<2x32xf32>
      %356 = arith.subf %355, %348 : vector<2x32xf32>
      %357 = arith.mulf %356, %354 : vector<2x32xf32>
      %358 = arith.mulf %348, %272 : vector<2x32xf32>
      %359 = arith.addf %357, %358 : vector<2x32xf32>
      %360 = arith.index_cast %292 : i32 to index
      %c0_104 = arith.constant 0 : index
      %c0_105 = arith.constant 0 : index
      %361 = vector.load %arg6[%360, %c0_104, %c0_105] : memref<16x2x64xf32, #tpu.memory_space<vmem>>, vector<1x2x64xf32>
      %362 = vector.shape_cast %361 : vector<1x2x64xf32> to vector<2x64xf32>
      %363 = vector.extract_strided_slice %362 {offsets = [0, 32], sizes = [2, 32], strides = [1, 1]} : vector<2x64xf32> to vector<2x32xf32>
      %364 = tpu.concatenate %332, %363 in 1 : vector<2x32xf32>, vector<2x32xf32> -> vector<2x64xf32>
      %365 = arith.index_cast %292 : i32 to index
      %c0_106 = arith.constant 0 : index
      %c0_107 = arith.constant 0 : index
      %366 = vector.load %arg6[%365, %c0_106, %c0_107] : memref<16x2x64xf32, #tpu.memory_space<vmem>>, vector<1x2x64xf32>
      %367 = vector.shape_cast %366 : vector<1x2x64xf32> to vector<2x64xf32>
      %368 = vector.shape_cast %364 : vector<2x64xf32> to vector<1x2x64xf32>
      tpu.vector_store %arg6[%365, %c0_106, %c0_107], %368 {strides = array<i32>} : memref<16x2x64xf32, #tpu.memory_space<vmem>>, vector<1x2x64xf32>,
      %369 = arith.index_cast %293 : i32 to index
      %c0_108 = arith.constant 0 : index
      %c0_109 = arith.constant 0 : index
      %370 = vector.load %arg6[%369, %c0_108, %c0_109] : memref<16x2x64xf32, #tpu.memory_space<vmem>>, vector<1x2x64xf32>
      %371 = vector.shape_cast %370 : vector<1x2x64xf32> to vector<2x64xf32>
      %372 = vector.extract_strided_slice %371 {offsets = [0, 0], sizes = [2, 32], strides = [1, 1]} : vector<2x64xf32> to vector<2x32xf32>
      %373 = tpu.concatenate %372, %359 in 1 : vector<2x32xf32>, vector<2x32xf32> -> vector<2x64xf32>
      %374 = arith.index_cast %293 : i32 to index
      %c0_110 = arith.constant 0 : index
      %c0_111 = arith.constant 0 : index
      %375 = vector.load %arg6[%374, %c0_110, %c0_111] : memref<16x2x64xf32, #tpu.memory_space<vmem>>, vector<1x2x64xf32>
      %376 = vector.shape_cast %375 : vector<1x2x64xf32> to vector<2x64xf32>
      %377 = vector.shape_cast %373 : vector<2x64xf32> to vector<1x2x64xf32>
      tpu.vector_store %arg6[%374, %c0_110, %c0_111], %377 {strides = array<i32>} : memref<16x2x64xf32, #tpu.memory_space<vmem>>, vector<1x2x64xf32>,
      scf.yield %332, %359 : vector<2x32xf32>, vector<2x32xf32>
    }
    %c4_i32_14 = arith.constant 4 : i32
    %c0_15 = arith.constant 0 : index
    %c0_16 = arith.constant 0 : index
    %19 = vector.load %arg4[%c0_15, %c0_16] : memref<64x32xf32, #tpu.memory_space<vmem>>, vector<64x32xf32>
    %20 = vector.extract_strided_slice %19 {offsets = [0, 0], sizes = [32, 32], strides = [1, 1]} : vector<64x32xf32> to vector<32x32xf32>
    %cst_17 = arith.constant dense<0.000000e+00> : vector<2x32xf32>
    %21 = tpu.matmul %18#0, %20, %cst_17 {dimension_numbers = #tpu.dot_dimension_numbers<[1], [0], [0], [1], [0, 0, 1, 1], [], []>} : vector<2x32xf32>, vector<32x32xf32>, vector<2x32xf32> -> vector<2x32xf32>
    %22 = vector.extract_strided_slice %19 {offsets = [32, 0], sizes = [32, 32], strides = [1, 1]} : vector<64x32xf32> to vector<32x32xf32>
    %cst_18 = arith.constant dense<0.000000e+00> : vector<2x32xf32>
    %23 = tpu.matmul %18#1, %22, %cst_18 {dimension_numbers = #tpu.dot_dimension_numbers<[1], [0], [0], [1], [0, 0, 1, 1], [], []>} : vector<2x32xf32>, vector<32x32xf32>, vector<2x32xf32> -> vector<2x32xf32>
    %24 = arith.addf %21, %23 : vector<2x32xf32>
    %c0_19 = arith.constant 0 : index
    %c0_20 = arith.constant 0 : index
    %25 = vector.load %arg5[%c0_19, %c0_20] : memref<1x32xf32, #tpu.memory_space<vmem>>, vector<1x32xf32>
    %26 = vector.broadcast %25 : vector<1x32xf32> to vector<2x32xf32>
    %27 = arith.addf %24, %26 : vector<2x32xf32>
    %28 = math.tanh %27 : vector<2x32xf32>
    %c0_21 = arith.constant 0 : index
    %c0_22 = arith.constant 0 : index
    %29 = vector.load %arg7[%c0_21, %c0_22] : memref<2x32xf32, #tpu.memory_space<vmem>>, vector<2x32xf32>
    tpu.vector_store %arg7[%c0_21, %c0_22], %28 {strides = array<i32>} : memref<2x32xf32, #tpu.memory_space<vmem>>, vector<2x32xf32>,
    return
  }
  func.func @transform_0(%arg0: i32) -> (i32, i32, i32) {
    %c0_i32 = arith.constant 0 : i32
    %c0_i32_0 = arith.constant 0 : i32
    %c0_i32_1 = arith.constant 0 : i32
    %c0_i32_2 = arith.constant 0 : i32
    return %c0_i32, %c0_i32_0, %c0_i32_1 : i32, i32, i32
  }
  func.func @transform_1(%arg0: i32) -> (i32, i32, i32) {
    %c0_i32 = arith.constant 0 : i32
    %c0_i32_0 = arith.constant 0 : i32
    %c0_i32_1 = arith.constant 0 : i32
    %c0_i32_2 = arith.constant 0 : i32
    return %c0_i32, %c0_i32_0, %c0_i32_1 : i32, i32, i32
  }
  func.func @transform_2(%arg0: i32) -> (i32, i32, i32) {
    %c0_i32 = arith.constant 0 : i32
    %c0_i32_0 = arith.constant 0 : i32
    %c0_i32_1 = arith.constant 0 : i32
    %c0_i32_2 = arith.constant 0 : i32
    return %c0_i32, %c0_i32_0, %c0_i32_1 : i32, i32, i32
  }
  func.func @transform_3(%arg0: i32) -> (i32, i32) {
    %c0_i32 = arith.constant 0 : i32
    %c0_i32_0 = arith.constant 0 : i32
    %c0_i32_1 = arith.constant 0 : i32
    return %c0_i32, %c0_i32_0 : i32, i32
  }
  func.func @transform_4(%arg0: i32) -> (i32, i32) {
    %c0_i32 = arith.constant 0 : i32
    %c0_i32_0 = arith.constant 0 : i32
    %c0_i32_1 = arith.constant 0 : i32
    return %c0_i32, %c0_i32_0 : i32, i32
  }
  func.func @transform_5(%arg0: i32) -> (i32, i32, i32) {
    %c0_i32 = arith.constant 0 : i32
    %c0_i32_0 = arith.constant 0 : i32
    %c0_i32_1 = arith.constant 0 : i32
    %c0_i32_2 = arith.constant 0 : i32
    return %c0_i32, %c0_i32_0, %c0_i32_1 : i32, i32, i32
  }
  func.func @transform_6(%arg0: i32) -> (i32, i32) {
    %c0_i32 = arith.constant 0 : i32
    %c0_i32_0 = arith.constant 0 : i32
    %c0_i32_1 = arith.constant 0 : i32
    return %c0_i32, %c0_i32_0 : i32, i32
  }
}

</mosaic_0001>

<llo_original>
// kernel: encoder_forward.2
$region0: #{encoder_forward.2}
  #allocation0 [shape = 'u32[]', space=smem, size = 0x4, offset = 0x4, fixed_abs, tag = 'smem constant byte address 0x4 - core index']
  #allocation1 [shape = 'u32[144,128]{1,0:T(1,128)}', space=vmem, size = 0x12000, scoped, tag = 'internal scratch']
  %s0 = inlined_call_operand.vmem [shape: f32[32,32], index: 0, kind: input, shape index: {}]
  %s1 = inlined_call_operand.vmem [shape: f32[32,192], index: 1, kind: input, shape index: {}]
  %s2 = inlined_call_operand.vmem [shape: f32[1,192], index: 2, kind: input, shape index: {}]
  %s3 = inlined_call_operand.vmem [shape: bf16[32,192], index: 3, kind: output, shape index: {}]
  %s4 = sld [smem:[#allocation0]]
  $region22: #{encoder_forward.2} parent=0
    _
  %s6 = ssub.s32 1, %s4
  %s7 = scalar_select 0, %s6, %s4
  // Predicated region
  $region2: #{encoder_forward.2} parent=0 // pred_check
    _
  $region3: #{encoder_forward.2} parent=0 // pred_check_branch
    %9 = sbr.rel (0) target = $region5
  $region4: #{encoder_forward.2} parent=0 // pred_region
    _
  $region5: #{encoder_forward.2} parent=0 // pred_fallthru
    _
  // Predicated region
  $region6: #{encoder_forward.2} parent=0 // pred_check
    _
  $region7: #{encoder_forward.2} parent=0 // pred_check_branch
    %11 = sbr.rel (0) target = $region9
  $region8: #{encoder_forward.2} parent=0 // pred_region
    _
  $region9: #{encoder_forward.2} parent=0 // pred_fallthru
    _
  // Predicated region
  $region10: #{encoder_forward.2} parent=0 // pred_check
    _
  $region11: #{encoder_forward.2} parent=0 // pred_check_branch
    %13 = sbr.rel (0) target = $region13
  $region12: #{encoder_forward.2} parent=0 // pred_region
    _
  $region13: #{encoder_forward.2} parent=0 // pred_fallthru
    _
  %v15 = vld [vmem:[%s0] sm:$0xff]
  %v16 = vld [vmem:[%s0 + $0x8] sm:$0xff]
  %v17 = vld [vmem:[%s0 + $0x10] sm:$0xff]
  %v18 = vld [vmem:[%s0 + $0x18] sm:$0xff]
  %v19 = vpack.c.bf16 %v16, %v15
  %v20 = vpack.c.bf16 %v18, %v17
  %v21 = vld [vmem:[%s1] sm:$0xff]
  %v22 = vld [vmem:[%s1 + $0x8] sm:$0xff]
  %v23 = vld [vmem:[%s1 + $0x10] sm:$0xff]
  %v24 = vld [vmem:[%s1 + $0x18] sm:$0xff]
  %v25 = vld [vmem:[%s1 + $0x20] sm:$0xff]
  %v26 = vld [vmem:[%s1 + $0x28] sm:$0xff]
  %v27 = vld [vmem:[%s1 + $0x30] sm:$0xff]
  %v28 = vld [vmem:[%s1 + $0x38] sm:$0xff]
  %v29 = vpack.c.bf16 %v23, %v21
  %v30 = vpack.c.bf16 %v24, %v22
  %v31 = vpack.c.bf16 %v27, %v25
  %v32 = vpack.c.bf16 %v28, %v26
  %v33 = vld [vmem:[%s2] sm:$0x3]
  %v35 = vlaneseq
  %v36 = vshrl.u32 %v35, 7
  %v37 = vsub.s32 0, %v36
  %v38 = vrot.slane %v33, %v37
  %v39 = vlaneseq
  %v40 = vshrl.u32 %v39, 7
  %v41 = vsub.s32 1, %v40
  %v42 = vrot.slane %v33, %v41
  %vm45 = vcmask 261120
  %v47 = vsel %vm45, %v19, 0
  %v50 = vsel %vm45, %v20, 0
  %52 = vmatprep.subr.bf16.mxu0 %v30
  %53 = vmatpush1.bf16.msra.mxu0 %v29
  %54 = vmatprep.subr.bf16.mxu0 %v32
  %55 = vmatpush1.bf16.msra.mxu0 %v31
  %56 = vmatprep.subr.bf16.mxu0 0
  %57 = vmatpush1.bf16.msra.mxu0 0
  %58 = vmatprep.subr.bf16.mxu0 0
  %59 = vmatpush1.bf16.msra.mxu0 0
  %60 = vmatprep.subr.bf16.mxu0 0
  %61 = vmatpush1.bf16.msra.mxu0 0
  %62 = vmatprep.subr.bf16.mxu0 0
  %63 = vmatpush1.bf16.msra.mxu0 0
  %64 = vmatprep.subr.bf16.mxu0 0
  %65 = vmatpush1.bf16.msra.mxu0 0
  %66 = vmatprep.subr.bf16.mxu0 0
  %67 = vmatpush1.bf16.msra.mxu0 0
  %68 = vmatprep.subr.bf16.mxu0 0
  %69 = vmatpush1.bf16.msra.mxu0 0
  %70 = vmatprep.subr.bf16.mxu0 0
  %71 = vmatpush1.bf16.msra.mxu0 0
  %72 = vmatprep.subr.bf16.mxu0 0
  %73 = vmatpush1.bf16.msra.mxu0 0
  %74 = vmatprep.subr.bf16.mxu0 0
  %75 = vmatpush1.bf16.msra.mxu0 0
  %76 = vmatprep.subr.bf16.mxu0 0
  %77 = vmatpush1.bf16.msra.mxu0 0
  %78 = vmatprep.subr.bf16.mxu0 0
  %79 = vmatpush1.bf16.msra.mxu0 0
  %80 = vmatprep.subr.bf16.mxu0 0
  %81 = vmatpush1.bf16.msra.mxu0 0
  %82 = vmatprep.subr.bf16.mxu0 0
  %83 = vmatpush1.bf16.msra.mxu0 0
  %84 = vmatprep.mubr.bf16.mxu0 0
  %85 = vmatmul.mubr.bf16.gmra.mrb[0].mxu0 %v47
  %v86 = vpop.f32.mrb[0].mxu0
  %v87 = vadd.f32 %v38, %v86
  %v88 = vpop.f32.mrb[0].mxu0
  %v89 = vadd.f32 %v42, %v88
  %v90 = vpop.f32.mrb[0].mxu0
  %v91 = vadd.f32 %v38, %v90
  %v92 = vpop.f32.mrb[0].mxu0
  %v93 = vadd.f32 %v42, %v92
  %94 = vmatprep.mubr.bf16.mxu0 0
  %95 = vmatmul.mubr.bf16.gmra.mrb[0].mxu0 %v50
  %v96 = vpop.f32.mrb[0].mxu0
  %v97 = vadd.f32 %v38, %v96
  %v98 = vpop.f32.mrb[0].mxu0
  %v99 = vadd.f32 %v42, %v98
  %v100 = vpop.f32.mrb[0].mxu0
  %v101 = vadd.f32 %v38, %v100
  %v102 = vpop.f32.mrb[0].mxu0
  %v103 = vadd.f32 %v42, %v102
  %104 = vdwg.mxu0
  %v105 = vpack.c.bf16 %v91, %v87
  %v106 = vpack.c.bf16 %v93, %v89
  %v107 = vpack.c.bf16 %v101, %v97
  %v108 = vpack.c.bf16 %v103, %v99
  %v113 = vunpack.c.l.b16 %v105
  %v114 = vunpack.c.l.b16 %v106
  %v115 = vunpack.c.h.b16 %v105
  %v116 = vunpack.c.h.b16 %v106
  %v117 = vunpack.c.l.b16 %v107
  %v118 = vunpack.c.l.b16 %v108
  %v119 = vunpack.c.h.b16 %v107
  %v120 = vunpack.c.h.b16 %v108
  %v121 = vpack.c.b16 %v114, %v113
  %v122 = vpack.c.b16 %v116, %v115
  %v123 = vpack.c.b16 %v118, %v117
  %v124 = vpack.c.b16 %v120, %v119
  %vm129 = vcmask 1043456
  %vm130 = vcmask 523268
  %vm131 = vmor %vm130, %vm129
  %132 = vst.msk [vmem:[%s3] sm:$0xff] %vm131, %v121
  %133 = vst.msk [vmem:[%s3 + $0x8] sm:$0xff] %vm131, %v122
  %134 = vst.msk [vmem:[%s3 + $0x10] sm:$0xff] %vm131, %v123
  %135 = vst.msk [vmem:[%s3 + $0x18] sm:$0xff] %vm131, %v124
  // Predicated region
  $region14: #{encoder_forward.2} parent=0 // pred_check
    _
  $region15: #{encoder_forward.2} parent=0 // pred_check_branch
    %137 = sbr.rel (0) target = $region17
  $region16: #{encoder_forward.2} parent=0 // pred_region
    _
  $region17: #{encoder_forward.2} parent=0 // pred_fallthru
    _
  // Predicated region
  $region18: #{encoder_forward.2} parent=0 // pred_check
    _
  $region19: #{encoder_forward.2} parent=0 // pred_check_branch
    %139 = sbr.rel (0) target = $region21
  $region20: #{encoder_forward.2} parent=0 // pred_region
    _
  $region21: #{encoder_forward.2} parent=0 // pred_fallthru
    _

// kernel: encoder_forward.3
$region0: #{encoder_forward.3}
  #allocation0 [shape = 'u32[]', space=smem, size = 0x4, offset = 0x4, fixed_abs, tag = 'smem constant byte address 0x4 - core index']
  #allocation1 [shape = 'u32[144,128]{1,0:T(1,128)}', space=vmem, size = 0x12000, scoped, tag = 'internal scratch']
  %s0 = inlined_call_operand.vmem [shape: bf16[16,2,192], index: 0, kind: input, shape index: {}]
  %s1 = inlined_call_operand.vmem [shape: f32[2,32,96], index: 1, kind: input, shape index: {}]
  %s2 = inlined_call_operand.vmem [shape: f32[2,1,32], index: 2, kind: input, shape index: {}]
  %s3 = inlined_call_operand.vmem [shape: f32[64,32], index: 3, kind: input, shape index: {}]
  %s4 = inlined_call_operand.vmem [shape: f32[1,32], index: 4, kind: input, shape index: {}]
  %s5 = inlined_call_operand.hbm [shape: f32[16,2,64], index: 5, kind: output, shape index: {0}]
  %s6 = inlined_call_operand.hbm [shape: f32[2,32], index: 6, kind: output, shape index: {1}]
  %7 = xla_tuple %s5, %s6
  %s8 = sld [smem:[#allocation0]]
  $region45: #{encoder_forward.3} parent=0
    _
  %s10 = ssub.s32 1, %s8
  %s11 = scalar_select 0, %s10, %s8
  $region1: #{encoder_forward.3} parent=0
    #allocation2 [shape = 'u8[16384]{0}', space=vmem, size = 0x4000, scoped, tag = 'output window, operand 0, single buffered']
    #allocation3 [shape = 's32[1]{0}', space=sflag, size = 0x4, scoped, tag = 'scoped memory for encoder_forward.3']
    #allocation4 [shape = 'u8[1024]{0}', space=vmem, size = 0x400, scoped, tag = 'output window, operand 1, single buffered']
    #allocation5 [shape = 's32[1]{0}', space=sflag, size = 0x4, scoped, tag = 'scoped memory for encoder_forward.3']
    %12 = vsyncpa [#allocation3], 0
    %13 = vsyncpa [#allocation5], 0
    // Predicated region
    $region2: #{encoder_forward.3} parent=1 // pred_check
      _
    $region3: #{encoder_forward.3} parent=1 // pred_check_branch
      %15 = sbr.rel (0) target = $region5
    $region4: #{encoder_forward.3} parent=1 // pred_region
      _
    $region5: #{encoder_forward.3} parent=1 // pred_fallthru
      _
    // Predicated region
    $region6: #{encoder_forward.3} parent=1 // pred_check
      _
    $region7: #{encoder_forward.3} parent=1 // pred_check_branch
      %17 = sbr.rel (0) target = $region9
    $region8: #{encoder_forward.3} parent=1 // pred_region
      _
    $region9: #{encoder_forward.3} parent=1 // pred_fallthru
      _
    // Predicated region
    $region10: #{encoder_forward.3} parent=1 // pred_check
      _
    $region11: #{encoder_forward.3} parent=1 // pred_check_branch
      %19 = sbr.rel (0) target = $region13
    $region12: #{encoder_forward.3} parent=1 // pred_region
      _
    $region13: #{encoder_forward.3} parent=1 // pred_fallthru
      _
    // Predicated region
    $region14: #{encoder_forward.3} parent=1 // pred_check
      _
    $region15: #{encoder_forward.3} parent=1 // pred_check_branch
      %21 = sbr.rel (0) target = $region17
    $region16: #{encoder_forward.3} parent=1 // pred_region
      _
    $region17: #{encoder_forward.3} parent=1 // pred_fallthru
      _
    // Predicated region
    $region18: #{encoder_forward.3} parent=1 // pred_check
      _
    $region19: #{encoder_forward.3} parent=1 // pred_check_branch
      %23 = sbr.rel (0) target = $region21
    $region20: #{encoder_forward.3} parent=1 // pred_region
      _
    $region21: #{encoder_forward.3} parent=1 // pred_fallthru
      _
    %v25 = vld [vmem:[%s1] sm:$0xff]
    %v26 = vld [vmem:[%s1 + $0x8] sm:$0xff]
    %v27 = vld [vmem:[%s1 + $0x10] sm:$0xff]
    %v28 = vld [vmem:[%s1 + $0x18] sm:$0xff]
    %v29 = vpack.c.bf16 %v26, %v25
    %v30 = vpack.c.bf16 %v28, %v27
    %s31 = scalar_lea.vmem %s1, 32
    %v32 = vld [vmem:[%s31] sm:$0xff]
    %v33 = vld [vmem:[%s31 + $0x8] sm:$0xff]
    %v34 = vld [vmem:[%s31 + $0x10] sm:$0xff]
    %v35 = vld [vmem:[%s31 + $0x18] sm:$0xff]
    %v36 = vpack.c.bf16 %v33, %v32
    %v37 = vpack.c.bf16 %v35, %v34
    %v38 = vld [vmem:[%s2] sm:$0x1]
    %v40 = vlaneseq
    %v41 = vshrl.u32 %v40, 7
    %v42 = vsub.s32 0, %v41
    %v43 = vrot.slane %v38, %v42
    %s44 = scalar_lea.vmem %s2, 1
    %v45 = vld [vmem:[%s44] sm:$0x1]
    %v47 = vlaneseq
    %v48 = vshrl.u32 %v47, 7
    %v49 = vsub.s32 0, %v48
    %v50 = vrot.slane %v45, %v49
    %vm51 = vcmask 517120
    %52 = vst.msk [vmem:[#allocation2] sm:$0x3] %vm51, 0.0
    %53 = vst.msk [vmem:[#allocation2 + $0x2] sm:$0x3] %vm51, 0.0
    %54 = vst.msk [vmem:[#allocation2 + $0x4] sm:$0x3] %vm51, 0.0
    %55 = vst.msk [vmem:[#allocation2 + $0x6] sm:$0x3] %vm51, 0.0
    %56 = vst.msk [vmem:[#allocation2 + $0x8] sm:$0x3] %vm51, 0.0
    %57 = vst.msk [vmem:[#allocation2 + $0xa] sm:$0x3] %vm51, 0.0
    %58 = vst.msk [vmem:[#allocation2 + $0xc] sm:$0x3] %vm51, 0.0
    %59 = vst.msk [vmem:[#allocation2 + $0xe] sm:$0x3] %vm51, 0.0
    %60 = vst.msk [vmem:[#allocation2 + $0x10] sm:$0x3] %vm51, 0.0
    %61 = vst.msk [vmem:[#allocation2 + $0x12] sm:$0x3] %vm51, 0.0
    %62 = vst.msk [vmem:[#allocation2 + $0x14] sm:$0x3] %vm51, 0.0
    %63 = vst.msk [vmem:[#allocation2 + $0x16] sm:$0x3] %vm51, 0.0
    %64 = vst.msk [vmem:[#allocation2 + $0x18] sm:$0x3] %vm51, 0.0
    %65 = vst.msk [vmem:[#allocation2 + $0x1a] sm:$0x3] %vm51, 0.0
    %66 = vst.msk [vmem:[#allocation2 + $0x1c] sm:$0x3] %vm51, 0.0
    %67 = vst.msk [vmem:[#allocation2 + $0x1e] sm:$0x3] %vm51, 0.0
    loop: start=0, step=1, limit=4
    $region22: #{encoder_forward.3} parent=1 // loop_pre_header
      _
    $region23: #{encoder_forward.3} parent=1 // loop_header
      %s69 = sphi 0, %s73
      %p70 = scmp.ge.s32.totalorder %s69, 4
      %v74 = vphi 0.0, %v877
      %v75 = vphi 0.0, %v932
    $region24: #{encoder_forward.3} parent=1 // loop_header_branch
      %72 = sbr.rel (%p70) target = $region28
    $region25: #{encoder_forward.3} parent=1 // loop_body
      %s76 = smul.u32 %s69, 4
      %s77 = ssub.s32 15, %s76
      %s78 = smul.u32 %s76, 2
      %s79 = scalar_lea.vmem %s0, %s78
      %v80 = vld [vmem:[%s79] sm:$0x3]
      %v81 = vunpack.c.l.bf16 %v80
      %s82 = smul.u32 %s77, 2
      %s83 = scalar_lea.vmem %s0, %s82
      %v84 = vld [vmem:[%s83] sm:$0x3]
      %v85 = vunpack.c.l.bf16 %v84
      %v86 = vpack.c.bf16 %v74, %v74
      %88 = vrot.lane.b32.xlu0 %v86, 96
      %v89 = vpop.permute.xlu0 %88
      %vm90 = vcmask 261120
      %v92 = vsel %vm90, %v89, 0
      %94 = vmatprep.subr.bf16.mxu0 0
      %95 = vmatpush1.bf16.msra.mxu0 %v29
      %96 = vmatprep.subr.bf16.mxu0 0
      %97 = vmatpush1.bf16.msra.mxu0 %v30
      %98 = vmatprep.subr.bf16.mxu0 0
      %99 = vmatpush1.bf16.msra.mxu0 0
      %100 = vmatprep.subr.bf16.mxu0 0
      %101 = vmatpush1.bf16.msra.mxu0 0
      %102 = vmatprep.subr.bf16.mxu0 0
      %103 = vmatpush1.bf16.msra.mxu0 0
      %104 = vmatprep.subr.bf16.mxu0 0
      %105 = vmatpush1.bf16.msra.mxu0 0
      %106 = vmatprep.subr.bf16.mxu0 0
      %107 = vmatpush1.bf16.msra.mxu0 0
      %108 = vmatprep.subr.bf16.mxu0 0
      %109 = vmatpush1.bf16.msra.mxu0 0
      %110 = vmatprep.subr.bf16.mxu0 0
      %111 = vmatpush1.bf16.msra.mxu0 0
      %112 = vmatprep.subr.bf16.mxu0 0
      %113 = vmatpush1.bf16.msra.mxu0 0
      %114 = vmatprep.subr.bf16.mxu0 0
      %115 = vmatpush1.bf16.msra.mxu0 0
      %116 = vmatprep.subr.bf16.mxu0 0
      %117 = vmatpush1.bf16.msra.mxu0 0
      %118 = vmatprep.subr.bf16.mxu0 0
      %119 = vmatpush1.bf16.msra.mxu0 0
      %120 = vmatprep.subr.bf16.mxu0 0
      %121 = vmatpush1.bf16.msra.mxu0 0
      %122 = vmatprep.subr.bf16.mxu0 0
      %123 = vmatpush1.bf16.msra.mxu0 0
      %124 = vmatprep.subr.bf16.mxu0 0
      %125 = vmatpush1.bf16.msra.mxu0 0
      %126 = vmatprep.mubr.bf16.mxu0 0
      %127 = vmatmul.mubr.bf16.gmra.mrb[0].mxu0 %v92
      %v128 = vpop.f32.mrb[0].mxu0
      %v129 = vadd.f32 0.0, %v128
      %v130 = vpop.f32.mrb[0].mxu0
      %v131 = vpop.f32.mrb[0].mxu0
      %v132 = vpop.f32.mrb[0].mxu0
      %133 = vdwg.mxu0
      %v134 = vpack.c.bf16 %v75, %v75
      %v136 = vsel %vm90, %v134, 0
      %138 = vmatprep.subr.bf16.mxu0 0
      %139 = vmatpush1.bf16.msra.mxu0 %v36
      %140 = vmatprep.subr.bf16.mxu0 0
      %141 = vmatpush1.bf16.msra.mxu0 %v37
      %142 = vmatprep.subr.bf16.mxu0 0
      %143 = vmatpush1.bf16.msra.mxu0 0
      %144 = vmatprep.subr.bf16.mxu0 0
      %145 = vmatpush1.bf16.msra.mxu0 0
      %146 = vmatprep.subr.bf16.mxu0 0
      %147 = vmatpush1.bf16.msra.mxu0 0
      %148 = vmatprep.subr.bf16.mxu0 0
      %149 = vmatpush1.bf16.msra.mxu0 0
      %150 = vmatprep.subr.bf16.mxu0 0
      %151 = vmatpush1.bf16.msra.mxu0 0
      %152 = vmatprep.subr.bf16.mxu0 0
      %153 = vmatpush1.bf16.msra.mxu0 0
      %154 = vmatprep.subr.bf16.mxu0 0
      %155 = vmatpush1.bf16.msra.mxu0 0
      %156 = vmatprep.subr.bf16.mxu0 0
      %157 = vmatpush1.bf16.msra.mxu0 0
      %158 = vmatprep.subr.bf16.mxu0 0
      %159 = vmatpush1.bf16.msra.mxu0 0
      %160 = vmatprep.subr.bf16.mxu0 0
      %161 = vmatpush1.bf16.msra.mxu0 0
      %162 = vmatprep.subr.bf16.mxu0 0
      %163 = vmatpush1.bf16.msra.mxu0 0
      %164 = vmatprep.subr.bf16.mxu0 0
      %165 = vmatpush1.bf16.msra.mxu0 0
      %166 = vmatprep.subr.bf16.mxu0 0
      %167 = vmatpush1.bf16.msra.mxu0 0
      %168 = vmatprep.subr.bf16.mxu0 0
      %169 = vmatpush1.bf16.msra.mxu0 0
      %170 = vmatprep.mubr.bf16.mxu0 0
      %171 = vmatmul.mubr.bf16.gmra.mrb[0].mxu0 %v136
      %v172 = vpop.f32.mrb[0].mxu0
      %v173 = vadd.f32 0.0, %v172
      %v174 = vpop.f32.mrb[0].mxu0
      %v175 = vpop.f32.mrb[0].mxu0
      %v176 = vpop.f32.mrb[0].mxu0
      %177 = vdwg.mxu0
      %v178 = vadd.f32 %v81, %v129
      %v179 = vxor.u32 %v178, 2147483648
      %v180 = vmul.f32 %v179, 1.442695
      %v181 = vpow.pop %v180
      %v182 = vadd.f32 %v181, 1.0
      %v183 = vrcp.pop %v182
      %v184 = vmul.f32 1.0, %v183
      %185 = vrot.lane.b32.xlu0 %v43, 64
      %v186 = vpop.permute.xlu0 %185
      %v188 = vadd.f32 %v129, %v186
      %v191 = vunpack.c.l.s4 1983009808
      %v192 = vunpack.c.0.s8 %v191
      %v193 = vlaneseq
      %v194 = vshrl.u32 %v193, 7
      %v195 = vsub.s32 %v192, %v194
      %v196 = vrot.slane %v188, %v195
      %197 = vrot.lane.b32.xlu0 %v196, 64
      %v198 = vpop.permute.xlu0 %197
      %v200 = vmul.f32 %v184, %v198
      %202 = vrot.lane.b32.xlu0 %v200, 64
      %v203 = vpop.permute.xlu0 %202
      %v205 = vadd.f32 %v81, %v203
      %v206 = vtanh.pop %v205
      %v207 = vsub.f32 1.0, %v184
      %209 = vrot.lane.b32.xlu0 %v206, 96
      %v210 = vpop.permute.xlu0 %209
      %v212 = vmul.f32 %v207, %v210
      %v213 = vmul.f32 %v184, %v74
      %v214 = vadd.f32 %v212, %v213
      %v217 = vunpack.c.l.s4 1983009808
      %v218 = vunpack.c.0.s8 %v217
      %v219 = vlaneseq
      %v220 = vshrl.u32 %v219, 7
      %v221 = vsub.s32 %v218, %v220
      %v222 = vrot.slane %v173, %v221
      %223 = vrot.lane.b32.xlu0 %v222, 96
      %v224 = vpop.permute.xlu0 %223
      %v226 = vadd.f32 %v85, %v224
      %v227 = vxor.u32 %v226, 2147483648
      %v228 = vmul.f32 %v227, 1.442695
      %v229 = vpow.pop %v228
      %v230 = vadd.f32 %v229, 1.0
      %v231 = vrcp.pop %v230
      %v232 = vmul.f32 1.0, %v231
      %v234 = vrot.slane %v85, 2
      %v236 = vadd.f32 %v234, %v224
      %v237 = vxor.u32 %v236, 2147483648
      %v238 = vmul.f32 %v237, 1.442695
      %v239 = vpow.pop %v238
      %v240 = vadd.f32 %v239, 1.0
      %v241 = vrcp.pop %v240
      %v242 = vmul.f32 1.0, %v241
      %243 = vrot.lane.b32.xlu0 %v50, 64
      %v244 = vpop.permute.xlu0 %243
      %v246 = vadd.f32 %v173, %v244
      %v249 = vunpack.c.l.s4 1983009808
      %v250 = vunpack.c.0.s8 %v249
      %v251 = vlaneseq
      %v252 = vshrl.u32 %v251, 7
      %v253 = vsub.s32 %v250, %v252
      %v254 = vrot.slane %v246, %v253
      %255 = vrot.lane.b32.xlu0 %v254, 32
      %v256 = vpop.permute.xlu0 %255
      %v258 = vmul.f32 %v232, %v256
      %259 = vrot.lane.b32.xlu0 %v85, 96
      %v260 = vpop.permute.xlu0 %259
      %v261 = vrot.slane %v260, 2
      %264 = vrot.lane.b32.xlu0 %v258, 32
      %v265 = vpop.permute.xlu0 %264
      %v267 = vadd.f32 %v261, %v265
      %v268 = vtanh.pop %v267
      %v269 = vsub.f32 1.0, %v242
      %v270 = vmul.f32 %v269, %v268
      %v271 = vmul.f32 %v242, %v75
      %v272 = vadd.f32 %v270, %v271
      %s273 = scalar_lea.vmem [#allocation2], %s78
      %v274 = vld [vmem:[%s273] sm:$0x3]
      %v277 = vunpack.c.l.s4 1983009808
      %v278 = vunpack.c.0.s8 %v277
      %v279 = vlaneseq
      %v280 = vshrl.u32 %v279, 7
      %v281 = vsub.s32 %v278, %v280
      %v282 = vrot.slane %v214, %v281
      %283 = vrot.lane.b32.xlu0 %v282, 96
      %v284 = vpop.permute.xlu0 %283
      %v286 = vsel %vm90, %v284, %v274
      %287 = vst.msk [vmem:[%s273] sm:$0x3] %vm51, %v286
      %s288 = scalar_lea.vmem [#allocation2], %s82
      %v289 = vld [vmem:[%s288] sm:$0x3]
      %v292 = vunpack.c.l.s4 1983009808
      %v293 = vunpack.c.0.s8 %v292
      %v294 = vlaneseq
      %v295 = vshrl.u32 %v294, 7
      %v296 = vsub.s32 %v293, %v295
      %v297 = vrot.slane %v272, %v296
      %298 = vrot.lane.b32.xlu0 %v297, 32
      %v299 = vpop.permute.xlu0 %298
      %v301 = vsel %vm90, %v289, %v299
      %302 = vst.msk [vmem:[%s288] sm:$0x3] %vm51, %v301
      %s303 = sadd.s32 %s76, 1
      %s304 = ssub.s32 14, %s76
      %s305 = smul.u32 %s303, 2
      %s306 = scalar_lea.vmem %s0, %s305
      %v307 = vld [vmem:[%s306] sm:$0x3]
      %v308 = vunpack.c.l.bf16 %v307
      %s309 = smul.u32 %s304, 2
      %s310 = scalar_lea.vmem %s0, %s309
      %v311 = vld [vmem:[%s310] sm:$0x3]
      %v312 = vunpack.c.l.bf16 %v311
      %v313 = vpack.c.bf16 %v214, %v214
      %315 = vrot.lane.b32.xlu0 %v313, 96
      %v316 = vpop.permute.xlu0 %315
      %v318 = vsel %vm90, %v316, 0
      %320 = vmatprep.subr.bf16.mxu0 0
      %321 = vmatpush1.bf16.msra.mxu0 %v29
      %322 = vmatprep.subr.bf16.mxu0 0
      %323 = vmatpush1.bf16.msra.mxu0 %v30
      %324 = vmatprep.subr.bf16.mxu0 0
      %325 = vmatpush1.bf16.msra.mxu0 0
      %326 = vmatprep.subr.bf16.mxu0 0
      %327 = vmatpush1.bf16.msra.mxu0 0
      %328 = vmatprep.subr.bf16.mxu0 0
      %329 = vmatpush1.bf16.msra.mxu0 0
      %330 = vmatprep.subr.bf16.mxu0 0
      %331 = vmatpush1.bf16.msra.mxu0 0
      %332 = vmatprep.subr.bf16.mxu0 0
      %333 = vmatpush1.bf16.msra.mxu0 0
      %334 = vmatprep.subr.bf16.mxu0 0
      %335 = vmatpush1.bf16.msra.mxu0 0
      %336 = vmatprep.subr.bf16.mxu0 0
      %337 = vmatpush1.bf16.msra.mxu0 0
      %338 = vmatprep.subr.bf16.mxu0 0
      %339 = vmatpush1.bf16.msra.mxu0 0
      %340 = vmatprep.subr.bf16.mxu0 0
      %341 = vmatpush1.bf16.msra.mxu0 0
      %342 = vmatprep.subr.bf16.mxu0 0
      %343 = vmatpush1.bf16.msra.mxu0 0
      %344 = vmatprep.subr.bf16.mxu0 0
      %345 = vmatpush1.bf16.msra.mxu0 0
      %346 = vmatprep.subr.bf16.mxu0 0
      %347 = vmatpush1.bf16.msra.mxu0 0
      %348 = vmatprep.subr.bf16.mxu0 0
      %349 = vmatpush1.bf16.msra.mxu0 0
      %350 = vmatprep.subr.bf16.mxu0 0
      %351 = vmatpush1.bf16.msra.mxu0 0
      %352 = vmatprep.mubr.bf16.mxu0 0
      %353 = vmatmul.mubr.bf16.gmra.mrb[0].mxu0 %v318
      %v354 = vpop.f32.mrb[0].mxu0
      %v355 = vadd.f32 0.0, %v354
      %v356 = vpop.f32.mrb[0].mxu0
      %v357 = vpop.f32.mrb[0].mxu0
      %v358 = vpop.f32.mrb[0].mxu0
      %359 = vdwg.mxu0
      %v360 = vpack.c.bf16 %v272, %v272
      %v362 = vsel %vm90, %v360, 0
      %364 = vmatprep.subr.bf16.mxu0 0
      %365 = vmatpush1.bf16.msra.mxu0 %v36
      %366 = vmatprep.subr.bf16.mxu0 0
      %367 = vmatpush1.bf16.msra.mxu0 %v37
      %368 = vmatprep.subr.bf16.mxu0 0
      %369 = vmatpush1.bf16.msra.mxu0 0
      %370 = vmatprep.subr.bf16.mxu0 0
      %371 = vmatpush1.bf16.msra.mxu0 0
      %372 = vmatprep.subr.bf16.mxu0 0
      %373 = vmatpush1.bf16.msra.mxu0 0
      %374 = vmatprep.subr.bf16.mxu0 0
      %375 = vmatpush1.bf16.msra.mxu0 0
      %376 = vmatprep.subr.bf16.mxu0 0
      %377 = vmatpush1.bf16.msra.mxu0 0
      %378 = vmatprep.subr.bf16.mxu0 0
      %379 = vmatpush1.bf16.msra.mxu0 0
      %380 = vmatprep.subr.bf16.mxu0 0
      %381 = vmatpush1.bf16.msra.mxu0 0
      %382 = vmatprep.subr.bf16.mxu0 0
      %383 = vmatpush1.bf16.msra.mxu0 0
      %384 = vmatprep.subr.bf16.mxu0 0
      %385 = vmatpush1.bf16.msra.mxu0 0
      %386 = vmatprep.subr.bf16.mxu0 0
      %387 = vmatpush1.bf16.msra.mxu0 0
      %388 = vmatprep.subr.bf16.mxu0 0
      %389 = vmatpush1.bf16.msra.mxu0 0
      %390 = vmatprep.subr.bf16.mxu0 0
      %391 = vmatpush1.bf16.msra.mxu0 0
      %392 = vmatprep.subr.bf16.mxu0 0
      %393 = vmatpush1.bf16.msra.mxu0 0
      %394 = vmatprep.subr.bf16.mxu0 0
      %395 = vmatpush1.bf16.msra.mxu0 0
      %396 = vmatprep.mubr.bf16.mxu0 0
      %397 = vmatmul.mubr.bf16.gmra.mrb[0].mxu0 %v362
      %v398 = vpop.f32.mrb[0].mxu0
      %v399 = vadd.f32 0.0, %v398
      %v400 = vpop.f32.mrb[0].mxu0
      %v401 = vpop.f32.mrb[0].mxu0
      %v402 = vpop.f32.mrb[0].mxu0
      %403 = vdwg.mxu0
      %v404 = vadd.f32 %v308, %v355
      %v405 = vxor.u32 %v404, 2147483648
      %v406 = vmul.f32 %v405, 1.442695
      %v407 = vpow.pop %v406
      %v408 = vadd.f32 %v407, 1.0
      %v409 = vrcp.pop %v408
      %v410 = vmul.f32 1.0, %v409
      %v411 = vadd.f32 %v355, %v186
      %v414 = vunpack.c.l.s4 1983009808
      %v415 = vunpack.c.0.s8 %v414
      %v416 = vlaneseq
      %v417 = vshrl.u32 %v416, 7
      %v418 = vsub.s32 %v415, %v417
      %v419 = vrot.slane %v411, %v418
      %420 = vrot.lane.b32.xlu0 %v419, 64
      %v421 = vpop.permute.xlu0 %420
      %v423 = vmul.f32 %v410, %v421
      %425 = vrot.lane.b32.xlu0 %v423, 64
      %v426 = vpop.permute.xlu0 %425
      %v428 = vadd.f32 %v308, %v426
      %v429 = vtanh.pop %v428
      %v430 = vsub.f32 1.0, %v410
      %432 = vrot.lane.b32.xlu0 %v429, 96
      %v433 = vpop.permute.xlu0 %432
      %v435 = vmul.f32 %v430, %v433
      %v436 = vmul.f32 %v410, %v214
      %v437 = vadd.f32 %v435, %v436
      %v440 = vunpack.c.l.s4 1983009808
      %v441 = vunpack.c.0.s8 %v440
      %v442 = vlaneseq
      %v443 = vshrl.u32 %v442, 7
      %v444 = vsub.s32 %v441, %v443
      %v445 = vrot.slane %v399, %v444
      %446 = vrot.lane.b32.xlu0 %v445, 96
      %v447 = vpop.permute.xlu0 %446
      %v449 = vadd.f32 %v312, %v447
      %v450 = vxor.u32 %v449, 2147483648
      %v451 = vmul.f32 %v450, 1.442695
      %v452 = vpow.pop %v451
      %v453 = vadd.f32 %v452, 1.0
      %v454 = vrcp.pop %v453
      %v455 = vmul.f32 1.0, %v454
      %v457 = vrot.slane %v312, 2
      %v459 = vadd.f32 %v457, %v447
      %v460 = vxor.u32 %v459, 2147483648
      %v461 = vmul.f32 %v460, 1.442695
      %v462 = vpow.pop %v461
      %v463 = vadd.f32 %v462, 1.0
      %v464 = vrcp.pop %v463
      %v465 = vmul.f32 1.0, %v464
      %v466 = vadd.f32 %v399, %v244
      %v469 = vunpack.c.l.s4 1983009808
      %v470 = vunpack.c.0.s8 %v469
      %v471 = vlaneseq
      %v472 = vshrl.u32 %v471, 7
      %v473 = vsub.s32 %v470, %v472
      %v474 = vrot.slane %v466, %v473
      %475 = vrot.lane.b32.xlu0 %v474, 32
      %v476 = vpop.permute.xlu0 %475
      %v478 = vmul.f32 %v455, %v476
      %479 = vrot.lane.b32.xlu0 %v312, 96
      %v480 = vpop.permute.xlu0 %479
      %v481 = vrot.slane %v480, 2
      %484 = vrot.lane.b32.xlu0 %v478, 32
      %v485 = vpop.permute.xlu0 %484
      %v487 = vadd.f32 %v481, %v485
      %v488 = vtanh.pop %v487
      %v489 = vsub.f32 1.0, %v465
      %v490 = vmul.f32 %v489, %v488
      %v491 = vmul.f32 %v465, %v272
      %v492 = vadd.f32 %v490, %v491
      %s493 = scalar_lea.vmem [#allocation2], %s305
      %v494 = vld [vmem:[%s493] sm:$0x3]
      %v497 = vunpack.c.l.s4 1983009808
      %v498 = vunpack.c.0.s8 %v497
      %v499 = vlaneseq
      %v500 = vshrl.u32 %v499, 7
      %v501 = vsub.s32 %v498, %v500
      %v502 = vrot.slane %v437, %v501
      %503 = vrot.lane.b32.xlu0 %v502, 96
      %v504 = vpop.permute.xlu0 %503
      %v506 = vsel %vm90, %v504, %v494
      %507 = vst.msk [vmem:[%s493] sm:$0x3] %vm51, %v506
      %s508 = scalar_lea.vmem [#allocation2], %s309
      %v509 = vld [vmem:[%s508] sm:$0x3]
      %v512 = vunpack.c.l.s4 1983009808
      %v513 = vunpack.c.0.s8 %v512
      %v514 = vlaneseq
      %v515 = vshrl.u32 %v514, 7
      %v516 = vsub.s32 %v513, %v515
      %v517 = vrot.slane %v492, %v516
      %518 = vrot.lane.b32.xlu0 %v517, 32
      %v519 = vpop.permute.xlu0 %518
      %v521 = vsel %vm90, %v509, %v519
      %522 = vst.msk [vmem:[%s508] sm:$0x3] %vm51, %v521
      %s523 = sadd.s32 %s76, 2
      %s524 = ssub.s32 13, %s76
      %s525 = smul.u32 %s523, 2
      %s526 = scalar_lea.vmem %s0, %s525
      %v527 = vld [vmem:[%s526] sm:$0x3]
      %v528 = vunpack.c.l.bf16 %v527
      %s529 = smul.u32 %s524, 2
      %s530 = scalar_lea.vmem %s0, %s529
      %v531 = vld [vmem:[%s530] sm:$0x3]
      %v532 = vunpack.c.l.bf16 %v531
      %v533 = vpack.c.bf16 %v437, %v437
      %535 = vrot.lane.b32.xlu0 %v533, 96
      %v536 = vpop.permute.xlu0 %535
      %v538 = vsel %vm90, %v536, 0
      %540 = vmatprep.subr.bf16.mxu0 0
      %541 = vmatpush1.bf16.msra.mxu0 %v29
      %542 = vmatprep.subr.bf16.mxu0 0
      %543 = vmatpush1.bf16.msra.mxu0 %v30
      %544 = vmatprep.subr.bf16.mxu0 0
      %545 = vmatpush1.bf16.msra.mxu0 0
      %546 = vmatprep.subr.bf16.mxu0 0
      %547 = vmatpush1.bf16.msra.mxu0 0
      %548 = vmatprep.subr.bf16.mxu0 0
      %549 = vmatpush1.bf16.msra.mxu0 0
      %550 = vmatprep.subr.bf16.mxu0 0
      %551 = vmatpush1.bf16.msra.mxu0 0
      %552 = vmatprep.subr.bf16.mxu0 0
      %553 = vmatpush1.bf16.msra.mxu0 0
      %554 = vmatprep.subr.bf16.mxu0 0
      %555 = vmatpush1.bf16.msra.mxu0 0
      %556 = vmatprep.subr.bf16.mxu0 0
      %557 = vmatpush1.bf16.msra.mxu0 0
      %558 = vmatprep.subr.bf16.mxu0 0
      %559 = vmatpush1.bf16.msra.mxu0 0
      %560 = vmatprep.subr.bf16.mxu0 0
      %561 = vmatpush1.bf16.msra.mxu0 0
      %562 = vmatprep.subr.bf16.mxu0 0
      %563 = vmatpush1.bf16.msra.mxu0 0
      %564 = vmatprep.subr.bf16.mxu0 0
      %565 = vmatpush1.bf16.msra.mxu0 0
      %566 = vmatprep.subr.bf16.mxu0 0
      %567 = vmatpush1.bf16.msra.mxu0 0
      %568 = vmatprep.subr.bf16.mxu0 0
      %569 = vmatpush1.bf16.msra.mxu0 0
      %570 = vmatprep.subr.bf16.mxu0 0
      %571 = vmatpush1.bf16.msra.mxu0 0
      %572 = vmatprep.mubr.bf16.mxu0 0
      %573 = vmatmul.mubr.bf16.gmra.mrb[0].mxu0 %v538
      %v574 = vpop.f32.mrb[0].mxu0
      %v575 = vadd.f32 0.0, %v574
      %v576 = vpop.f32.mrb[0].mxu0
      %v577 = vpop.f32.mrb[0].mxu0
      %v578 = vpop.f32.mrb[0].mxu0
      %579 = vdwg.mxu0
      %v580 = vpack.c.bf16 %v492, %v492
      %v582 = vsel %vm90, %v580, 0
      %584 = vmatprep.subr.bf16.mxu0 0
      %585 = vmatpush1.bf16.msra.mxu0 %v36
      %586 = vmatprep.subr.bf16.mxu0 0
      %587 = vmatpush1.bf16.msra.mxu0 %v37
      %588 = vmatprep.subr.bf16.mxu0 0
      %589 = vmatpush1.bf16.msra.mxu0 0
      %590 = vmatprep.subr.bf16.mxu0 0
      %591 = vmatpush1.bf16.msra.mxu0 0
      %592 = vmatprep.subr.bf16.mxu0 0
      %593 = vmatpush1.bf16.msra.mxu0 0
      %594 = vmatprep.subr.bf16.mxu0 0
      %595 = vmatpush1.bf16.msra.mxu0 0
      %596 = vmatprep.subr.bf16.mxu0 0
      %597 = vmatpush1.bf16.msra.mxu0 0
      %598 = vmatprep.subr.bf16.mxu0 0
      %599 = vmatpush1.bf16.msra.mxu0 0
      %600 = vmatprep.subr.bf16.mxu0 0
      %601 = vmatpush1.bf16.msra.mxu0 0
      %602 = vmatprep.subr.bf16.mxu0 0
      %603 = vmatpush1.bf16.msra.mxu0 0
      %604 = vmatprep.subr.bf16.mxu0 0
      %605 = vmatpush1.bf16.msra.mxu0 0
      %606 = vmatprep.subr.bf16.mxu0 0
      %607 = vmatpush1.bf16.msra.mxu0 0
      %608 = vmatprep.subr.bf16.mxu0 0
      %609 = vmatpush1.bf16.msra.mxu0 0
      %610 = vmatprep.subr.bf16.mxu0 0
      %611 = vmatpush1.bf16.msra.mxu0 0
      %612 = vmatprep.subr.bf16.mxu0 0
      %613 = vmatpush1.bf16.msra.mxu0 0
      %614 = vmatprep.subr.bf16.mxu0 0
      %615 = vmatpush1.bf16.msra.mxu0 0
      %616 = vmatprep.mubr.bf16.mxu0 0
      %617 = vmatmul.mubr.bf16.gmra.mrb[0].mxu0 %v582
      %v618 = vpop.f32.mrb[0].mxu0
      %v619 = vadd.f32 0.0, %v618
      %v620 = vpop.f32.mrb[0].mxu0
      %v621 = vpop.f32.mrb[0].mxu0
      %v622 = vpop.f32.mrb[0].mxu0
      %623 = vdwg.mxu0
      %v624 = vadd.f32 %v528, %v575
      %v625 = vxor.u32 %v624, 2147483648
      %v626 = vmul.f32 %v625, 1.442695
      %v627 = vpow.pop %v626
      %v628 = vadd.f32 %v627, 1.0
      %v629 = vrcp.pop %v628
      %v630 = vmul.f32 1.0, %v629
      %v631 = vadd.f32 %v575, %v186
      %v634 = vunpack.c.l.s4 1983009808
      %v635 = vunpack.c.0.s8 %v634
      %v636 = vlaneseq
      %v637 = vshrl.u32 %v636, 7
      %v638 = vsub.s32 %v635, %v637
      %v639 = vrot.slane %v631, %v638
      %640 = vrot.lane.b32.xlu0 %v639, 64
      %v641 = vpop.permute.xlu0 %640
      %v643 = vmul.f32 %v630, %v641
      %645 = vrot.lane.b32.xlu0 %v643, 64
      %v646 = vpop.permute.xlu0 %645
      %v648 = vadd.f32 %v528, %v646
      %v649 = vtanh.pop %v648
      %v650 = vsub.f32 1.0, %v630
      %652 = vrot.lane.b32.xlu0 %v649, 96
      %v653 = vpop.permute.xlu0 %652
      %v655 = vmul.f32 %v650, %v653
      %v656 = vmul.f32 %v630, %v437
      %v657 = vadd.f32 %v655, %v656
      %v660 = vunpack.c.l.s4 1983009808
      %v661 = vunpack.c.0.s8 %v660
      %v662 = vlaneseq
      %v663 = vshrl.u32 %v662, 7
      %v664 = vsub.s32 %v661, %v663
      %v665 = vrot.slane %v619, %v664
      %666 = vrot.lane.b32.xlu0 %v665, 96
      %v667 = vpop.permute.xlu0 %666
      %v669 = vadd.f32 %v532, %v667
      %v670 = vxor.u32 %v669, 2147483648
      %v671 = vmul.f32 %v670, 1.442695
      %v672 = vpow.pop %v671
      %v673 = vadd.f32 %v672, 1.0
      %v674 = vrcp.pop %v673
      %v675 = vmul.f32 1.0, %v674
      %v677 = vrot.slane %v532, 2
      %v679 = vadd.f32 %v677, %v667
      %v680 = vxor.u32 %v679, 2147483648
      %v681 = vmul.f32 %v680, 1.442695
      %v682 = vpow.pop %v681
      %v683 = vadd.f32 %v682, 1.0
      %v684 = vrcp.pop %v683
      %v685 = vmul.f32 1.0, %v684
      %v686 = vadd.f32 %v619, %v244
      %v689 = vunpack.c.l.s4 1983009808
      %v690 = vunpack.c.0.s8 %v689
      %v691 = vlaneseq
      %v692 = vshrl.u32 %v691, 7
      %v693 = vsub.s32 %v690, %v692
      %v694 = vrot.slane %v686, %v693
      %695 = vrot.lane.b32.xlu0 %v694, 32
      %v696 = vpop.permute.xlu0 %695
      %v698 = vmul.f32 %v675, %v696
      %699 = vrot.lane.b32.xlu0 %v532, 96
      %v700 = vpop.permute.xlu0 %699
      %v701 = vrot.slane %v700, 2
      %704 = vrot.lane.b32.xlu0 %v698, 32
      %v705 = vpop.permute.xlu0 %704
      %v707 = vadd.f32 %v701, %v705
      %v708 = vtanh.pop %v707
      %v709 = vsub.f32 1.0, %v685
      %v710 = vmul.f32 %v709, %v708
      %v711 = vmul.f32 %v685, %v492
      %v712 = vadd.f32 %v710, %v711
      %s713 = scalar_lea.vmem [#allocation2], %s525
      %v714 = vld [vmem:[%s713] sm:$0x3]
      %v717 = vunpack.c.l.s4 1983009808
      %v718 = vunpack.c.0.s8 %v717
      %v719 = vlaneseq
      %v720 = vshrl.u32 %v719, 7
      %v721 = vsub.s32 %v718, %v720
      %v722 = vrot.slane %v657, %v721
      %723 = vrot.lane.b32.xlu0 %v722, 96
      %v724 = vpop.permute.xlu0 %723
      %v726 = vsel %vm90, %v724, %v714
      %727 = vst.msk [vmem:[%s713] sm:$0x3] %vm51, %v726
      %s728 = scalar_lea.vmem [#allocation2], %s529
      %v729 = vld [vmem:[%s728] sm:$0x3]
      %v732 = vunpack.c.l.s4 1983009808
      %v733 = vunpack.c.0.s8 %v732
      %v734 = vlaneseq
      %v735 = vshrl.u32 %v734, 7
      %v736 = vsub.s32 %v733, %v735
      %v737 = vrot.slane %v712, %v736
      %738 = vrot.lane.b32.xlu0 %v737, 32
      %v739 = vpop.permute.xlu0 %738
      %v741 = vsel %vm90, %v729, %v739
      %742 = vst.msk [vmem:[%s728] sm:$0x3] %vm51, %v741
      %s743 = sadd.s32 %s76, 3
      %s744 = ssub.s32 12, %s76
      %s745 = smul.u32 %s743, 2
      %s746 = scalar_lea.vmem %s0, %s745
      %v747 = vld [vmem:[%s746] sm:$0x3]
      %v748 = vunpack.c.l.bf16 %v747
      %s749 = smul.u32 %s744, 2
      %s750 = scalar_lea.vmem %s0, %s749
      %v751 = vld [vmem:[%s750] sm:$0x3]
      %v752 = vunpack.c.l.bf16 %v751
      %v753 = vpack.c.bf16 %v657, %v657
      %755 = vrot.lane.b32.xlu0 %v753, 96
      %v756 = vpop.permute.xlu0 %755
      %v758 = vsel %vm90, %v756, 0
      %760 = vmatprep.subr.bf16.mxu0 0
      %761 = vmatpush1.bf16.msra.mxu0 %v29
      %762 = vmatprep.subr.bf16.mxu0 0
      %763 = vmatpush1.bf16.msra.mxu0 %v30
      %764 = vmatprep.subr.bf16.mxu0 0
      %765 = vmatpush1.bf16.msra.mxu0 0
      %766 = vmatprep.subr.bf16.mxu0 0
      %767 = vmatpush1.bf16.msra.mxu0 0
      %768 = vmatprep.subr.bf16.mxu0 0
      %769 = vmatpush1.bf16.msra.mxu0 0
      %770 = vmatprep.subr.bf16.mxu0 0
      %771 = vmatpush1.bf16.msra.mxu0 0
      %772 = vmatprep.subr.bf16.mxu0 0
      %773 = vmatpush1.bf16.msra.mxu0 0
      %774 = vmatprep.subr.bf16.mxu0 0
      %775 = vmatpush1.bf16.msra.mxu0 0
      %776 = vmatprep.subr.bf16.mxu0 0
      %777 = vmatpush1.bf16.msra.mxu0 0
      %778 = vmatprep.subr.bf16.mxu0 0
      %779 = vmatpush1.bf16.msra.mxu0 0
      %780 = vmatprep.subr.bf16.mxu0 0
      %781 = vmatpush1.bf16.msra.mxu0 0
      %782 = vmatprep.subr.bf16.mxu0 0
      %783 = vmatpush1.bf16.msra.mxu0 0
      %784 = vmatprep.subr.bf16.mxu0 0
      %785 = vmatpush1.bf16.msra.mxu0 0
      %786 = vmatprep.subr.bf16.mxu0 0
      %787 = vmatpush1.bf16.msra.mxu0 0
      %788 = vmatprep.subr.bf16.mxu0 0
      %789 = vmatpush1.bf16.msra.mxu0 0
      %790 = vmatprep.subr.bf16.mxu0 0
      %791 = vmatpush1.bf16.msra.mxu0 0
      %792 = vmatprep.mubr.bf16.mxu0 0
      %793 = vmatmul.mubr.bf16.gmra.mrb[0].mxu0 %v758
      %v794 = vpop.f32.mrb[0].mxu0
      %v795 = vadd.f32 0.0, %v794
      %v796 = vpop.f32.mrb[0].mxu0
      %v797 = vpop.f32.mrb[0].mxu0
      %v798 = vpop.f32.mrb[0].mxu0
      %799 = vdwg.mxu0
      %v800 = vpack.c.bf16 %v712, %v712
      %v802 = vsel %vm90, %v800, 0
      %804 = vmatprep.subr.bf16.mxu0 0
      %805 = vmatpush1.bf16.msra.mxu0 %v36
      %806 = vmatprep.subr.bf16.mxu0 0
      %807 = vmatpush1.bf16.msra.mxu0 %v37
      %808 = vmatprep.subr.bf16.mxu0 0
      %809 = vmatpush1.bf16.msra.mxu0 0
      %810 = vmatprep.subr.bf16.mxu0 0
      %811 = vmatpush1.bf16.msra.mxu0 0
      %812 = vmatprep.subr.bf16.mxu0 0
      %813 = vmatpush1.bf16.msra.mxu0 0
      %814 = vmatprep.subr.bf16.mxu0 0
      %815 = vmatpush1.bf16.msra.mxu0 0
      %816 = vmatprep.subr.bf16.mxu0 0
      %817 = vmatpush1.bf16.msra.mxu0 0
      %818 = vmatprep.subr.bf16.mxu0 0
      %819 = vmatpush1.bf16.msra.mxu0 0
      %820 = vmatprep.subr.bf16.mxu0 0
      %821 = vmatpush1.bf16.msra.mxu0 0
      %822 = vmatprep.subr.bf16.mxu0 0
      %823 = vmatpush1.bf16.msra.mxu0 0
      %824 = vmatprep.subr.bf16.mxu0 0
      %825 = vmatpush1.bf16.msra.mxu0 0
      %826 = vmatprep.subr.bf16.mxu0 0
      %827 = vmatpush1.bf16.msra.mxu0 0
      %828 = vmatprep.subr.bf16.mxu0 0
      %829 = vmatpush1.bf16.msra.mxu0 0
      %830 = vmatprep.subr.bf16.mxu0 0
      %831 = vmatpush1.bf16.msra.mxu0 0
      %832 = vmatprep.subr.bf16.mxu0 0
      %833 = vmatpush1.bf16.msra.mxu0 0
      %834 = vmatprep.subr.bf16.mxu0 0
      %835 = vmatpush1.bf16.msra.mxu0 0
      %836 = vmatprep.mubr.bf16.mxu0 0
      %837 = vmatmul.mubr.bf16.gmra.mrb[0].mxu0 %v802
      %v838 = vpop.f32.mrb[0].mxu0
      %v839 = vadd.f32 0.0, %v838
      %v840 = vpop.f32.mrb[0].mxu0
      %v841 = vpop.f32.mrb[0].mxu0
      %v842 = vpop.f32.mrb[0].mxu0
      %843 = vdwg.mxu0
      %v844 = vadd.f32 %v748, %v795
      %v845 = vxor.u32 %v844, 2147483648
      %v846 = vmul.f32 %v845, 1.442695
      %v847 = vpow.pop %v846
      %v848 = vadd.f32 %v847, 1.0
      %v849 = vrcp.pop %v848
      %v850 = vmul.f32 1.0, %v849
      %v851 = vadd.f32 %v795, %v186
      %v854 = vunpack.c.l.s4 1983009808
      %v855 = vunpack.c.0.s8 %v854
      %v856 = vlaneseq
      %v857 = vshrl.u32 %v856, 7
      %v858 = vsub.s32 %v855, %v857
      %v859 = vrot.slane %v851, %v858
      %860 = vrot.lane.b32.xlu0 %v859, 64
      %v861 = vpop.permute.xlu0 %860
      %v863 = vmul.f32 %v850, %v861
      %865 = vrot.lane.b32.xlu0 %v863, 64
      %v866 = vpop.permute.xlu0 %865
      %v868 = vadd.f32 %v748, %v866
      %v869 = vtanh.pop %v868
      %v870 = vsub.f32 1.0, %v850
      %872 = vrot.lane.b32.xlu0 %v869, 96
      %v873 = vpop.permute.xlu0 %872
      %v875 = vmul.f32 %v870, %v873
      %v876 = vmul.f32 %v850, %v657
      %v877 = vadd.f32 %v875, %v876
      %v880 = vunpack.c.l.s4 1983009808
      %v881 = vunpack.c.0.s8 %v880
      %v882 = vlaneseq
      %v883 = vshrl.u32 %v882, 7
      %v884 = vsub.s32 %v881, %v883
      %v885 = vrot.slane %v839, %v884
      %886 = vrot.lane.b32.xlu0 %v885, 96
      %v887 = vpop.permute.xlu0 %886
      %v889 = vadd.f32 %v752, %v887
      %v890 = vxor.u32 %v889, 2147483648
      %v891 = vmul.f32 %v890, 1.442695
      %v892 = vpow.pop %v891
      %v893 = vadd.f32 %v892, 1.0
      %v894 = vrcp.pop %v893
      %v895 = vmul.f32 1.0, %v894
      %v897 = vrot.slane %v752, 2
      %v899 = vadd.f32 %v897, %v887
      %v900 = vxor.u32 %v899, 2147483648
      %v901 = vmul.f32 %v900, 1.442695
      %v902 = vpow.pop %v901
      %v903 = vadd.f32 %v902, 1.0
      %v904 = vrcp.pop %v903
      %v905 = vmul.f32 1.0, %v904
      %v906 = vadd.f32 %v839, %v244
      %v909 = vunpack.c.l.s4 1983009808
      %v910 = vunpack.c.0.s8 %v909
      %v911 = vlaneseq
      %v912 = vshrl.u32 %v911, 7
      %v913 = vsub.s32 %v910, %v912
      %v914 = vrot.slane %v906, %v913
      %915 = vrot.lane.b32.xlu0 %v914, 32
      %v916 = vpop.permute.xlu0 %915
      %v918 = vmul.f32 %v895, %v916
      %919 = vrot.lane.b32.xlu0 %v752, 96
      %v920 = vpop.permute.xlu0 %919
      %v921 = vrot.slane %v920, 2
      %924 = vrot.lane.b32.xlu0 %v918, 32
      %v925 = vpop.permute.xlu0 %924
      %v927 = vadd.f32 %v921, %v925
      %v928 = vtanh.pop %v927
      %v929 = vsub.f32 1.0, %v905
      %v930 = vmul.f32 %v929, %v928
      %v931 = vmul.f32 %v905, %v712
      %v932 = vadd.f32 %v930, %v931
      %s933 = scalar_lea.vmem [#allocation2], %s745
      %v934 = vld [vmem:[%s933] sm:$0x3]
      %v937 = vunpack.c.l.s4 1983009808
      %v938 = vunpack.c.0.s8 %v937
      %v939 = vlaneseq
      %v940 = vshrl.u32 %v939, 7
      %v941 = vsub.s32 %v938, %v940
      %v942 = vrot.slane %v877, %v941
      %943 = vrot.lane.b32.xlu0 %v942, 96
      %v944 = vpop.permute.xlu0 %943
      %v946 = vsel %vm90, %v944, %v934
      %947 = vst.msk [vmem:[%s933] sm:$0x3] %vm51, %v946
      %s948 = scalar_lea.vmem [#allocation2], %s749
      %v949 = vld [vmem:[%s948] sm:$0x3]
      %v952 = vunpack.c.l.s4 1983009808
      %v953 = vunpack.c.0.s8 %v952
      %v954 = vlaneseq
      %v955 = vshrl.u32 %v954, 7
      %v956 = vsub.s32 %v953, %v955
      %v957 = vrot.slane %v932, %v956
      %958 = vrot.lane.b32.xlu0 %v957, 32
      %v959 = vpop.permute.xlu0 %958
      %v961 = vsel %vm90, %v949, %v959
      %962 = vst.msk [vmem:[%s948] sm:$0x3] %vm51, %v961
    $region26: #{encoder_forward.3} parent=1 // loop_footer
      %s73 = sadd.s32 1, %s69
    $region27: #{encoder_forward.3} parent=1 // loop_footer_branch
      %68 = sbr.rel target = $region23
    $region28: #{encoder_forward.3} parent=1 // loop_exit
      _
    %v963 = vld [vmem:[%s3] sm:$0xff]
    %v964 = vld [vmem:[%s3 + $0x8] sm:$0xff]
    %v965 = vld [vmem:[%s3 + $0x10] sm:$0xff]
    %v966 = vld [vmem:[%s3 + $0x18] sm:$0xff]
    %v967 = vld [vmem:[%s3 + $0x20] sm:$0xff]
    %v968 = vld [vmem:[%s3 + $0x28] sm:$0xff]
    %v969 = vld [vmem:[%s3 + $0x30] sm:$0xff]
    %v970 = vld [vmem:[%s3 + $0x38] sm:$0xff]
    %vm971 = vcmask 261120
    %v973 = vsel %vm971, %v75, 0
    %975 = vmatprep.subr.mxu0 0.0
    %976 = vmatpush1.msra.mxu0 %v967
    %977 = vmatprep.subr.mxu0 0.0
    %978 = vmatpush1.msra.mxu0 %v968
    %979 = vmatprep.subr.mxu0 0.0
    %980 = vmatpush1.msra.mxu0 %v969
    %981 = vmatprep.subr.mxu0 0.0
    %982 = vmatpush1.msra.mxu0 %v970
    %983 = vmatprep.subr.mxu0 0.0
    %984 = vmatpush1.msra.mxu0 0.0
    %985 = vmatprep.subr.mxu0 0.0
    %986 = vmatpush1.msra.mxu0 0.0
    %987 = vmatprep.subr.mxu0 0.0
    %988 = vmatpush1.msra.mxu0 0.0
    %989 = vmatprep.subr.mxu0 0.0
    %990 = vmatpush1.msra.mxu0 0.0
    %991 = vmatprep.subr.mxu0 0.0
    %992 = vmatpush1.msra.mxu0 0.0
    %993 = vmatprep.subr.mxu0 0.0
    %994 = vmatpush1.msra.mxu0 0.0
    %995 = vmatprep.subr.mxu0 0.0
    %996 = vmatpush1.msra.mxu0 0.0
    %997 = vmatprep.subr.mxu0 0.0
    %998 = vmatpush1.msra.mxu0 0.0
    %999 = vmatprep.subr.mxu0 0.0
    %1000 = vmatpush1.msra.mxu0 0.0
    %1001 = vmatprep.subr.mxu0 0.0
    %1002 = vmatpush1.msra.mxu0 0.0
    %1003 = vmatprep.subr.mxu0 0.0
    %1004 = vmatpush1.msra.mxu0 0.0
    %1005 = vmatprep.subr.mxu0 0.0
    %1006 = vmatpush1.msra.mxu0 0.0
    %1007 = vmatprep.subr.mxu0 0.0
    %1008 = vmatpush1.msra.mxu0 0.0
    %1009 = vmatprep.subr.mxu0 0.0
    %1010 = vmatpush1.msra.mxu0 0.0
    %1011 = vmatprep.subr.mxu0 0.0
    %1012 = vmatpush1.msra.mxu0 0.0
    %1013 = vmatprep.subr.mxu0 0.0
    %1014 = vmatpush1.msra.mxu0 0.0
    %1015 = vmatprep.subr.mxu0 0.0
    %1016 = vmatpush1.msra.mxu0 0.0
    %1017 = vmatprep.subr.mxu0 0.0
    %1018 = vmatpush1.msra.mxu0 0.0
    %1019 = vmatprep.subr.mxu0 0.0
    %1020 = vmatpush1.msra.mxu0 0.0
    %1021 = vmatprep.subr.mxu0 0.0
    %1022 = vmatpush1.msra.mxu0 0.0
    %1023 = vmatprep.subr.mxu0 0.0
    %1024 = vmatpush1.msra.mxu0 0.0
    %1025 = vmatprep.subr.mxu0 0.0
    %1026 = vmatpush1.msra.mxu0 0.0
    %1027 = vmatprep.subr.mxu0 0.0
    %1028 = vmatpush1.msra.mxu0 0.0
    %1029 = vmatprep.subr.mxu0 0.0
    %1030 = vmatpush1.msra.mxu0 0.0
    %1031 = vmatprep.subr.mxu0 0.0
    %1032 = vmatpush1.msra.mxu0 0.0
    %1033 = vmatprep.subr.mxu0 0.0
    %1034 = vmatpush1.msra.mxu0 0.0
    %1035 = vmatprep.subr.mxu0 0.0
    %1036 = vmatpush1.msra.mxu0 0.0
    %1037 = vmatprep.subr.mxu0 0.0
    %1038 = vmatpush1.msra.mxu0 0.0
    %1039 = vmatprep.mubr.f32.mxu0 0.0
    %1040 = vmatmul.mubr.f32.gmra.mrb[0].mxu0 %v973
    %v1041 = vpop.f32.mrb[0].mxu0
    %v1042 = vadd.f32 0.0, %v1041
    %v1043 = vpop.f32.mrb[0].mxu0
    %1044 = vdwg.mxu0
    %v1047 = vunpack.c.l.s4 1983009808
    %v1048 = vunpack.c.0.s8 %v1047
    %v1049 = vlaneseq
    %v1050 = vshrl.u32 %v1049, 7
    %v1051 = vsub.s32 %v1048, %v1050
    %v1052 = vrot.slane %v74, %v1051
    %1053 = vrot.lane.b32.xlu0 %v1052, 96
    %v1054 = vpop.permute.xlu0 %1053
    %v1055 = vsel %vm971, %v1054, 0
    %1057 = vmatprep.subr.mxu0 0.0
    %1058 = vmatpush1.msra.mxu0 %v963
    %1059 = vmatprep.subr.mxu0 0.0
    %1060 = vmatpush1.msra.mxu0 %v964
    %1061 = vmatprep.subr.mxu0 0.0
    %1062 = vmatpush1.msra.mxu0 %v965
    %1063 = vmatprep.subr.mxu0 0.0
    %1064 = vmatpush1.msra.mxu0 %v966
    %1065 = vmatprep.subr.mxu0 0.0
    %1066 = vmatpush1.msra.mxu0 0.0
    %1067 = vmatprep.subr.mxu0 0.0
    %1068 = vmatpush1.msra.mxu0 0.0
    %1069 = vmatprep.subr.mxu0 0.0
    %1070 = vmatpush1.msra.mxu0 0.0
    %1071 = vmatprep.subr.mxu0 0.0
    %1072 = vmatpush1.msra.mxu0 0.0
    %1073 = vmatprep.subr.mxu0 0.0
    %1074 = vmatpush1.msra.mxu0 0.0
    %1075 = vmatprep.subr.mxu0 0.0
    %1076 = vmatpush1.msra.mxu0 0.0
    %1077 = vmatprep.subr.mxu0 0.0
    %1078 = vmatpush1.msra.mxu0 0.0
    %1079 = vmatprep.subr.mxu0 0.0
    %1080 = vmatpush1.msra.mxu0 0.0
    %1081 = vmatprep.subr.mxu0 0.0
    %1082 = vmatpush1.msra.mxu0 0.0
    %1083 = vmatprep.subr.mxu0 0.0
    %1084 = vmatpush1.msra.mxu0 0.0
    %1085 = vmatprep.subr.mxu0 0.0
    %1086 = vmatpush1.msra.mxu0 0.0
    %1087 = vmatprep.subr.mxu0 0.0
    %1088 = vmatpush1.msra.mxu0 0.0
    %1089 = vmatprep.subr.mxu0 0.0
    %1090 = vmatpush1.msra.mxu0 0.0
    %1091 = vmatprep.subr.mxu0 0.0
    %1092 = vmatpush1.msra.mxu0 0.0
    %1093 = vmatprep.subr.mxu0 0.0
    %1094 = vmatpush1.msra.mxu0 0.0
    %1095 = vmatprep.subr.mxu0 0.0
    %1096 = vmatpush1.msra.mxu0 0.0
    %1097 = vmatprep.subr.mxu0 0.0
    %1098 = vmatpush1.msra.mxu0 0.0
    %1099 = vmatprep.subr.mxu0 0.0
    %1100 = vmatpush1.msra.mxu0 0.0
    %1101 = vmatprep.subr.mxu0 0.0
    %1102 = vmatpush1.msra.mxu0 0.0
    %1103 = vmatprep.subr.mxu0 0.0
    %1104 = vmatpush1.msra.mxu0 0.0
    %1105 = vmatprep.subr.mxu0 0.0
    %1106 = vmatpush1.msra.mxu0 0.0
    %1107 = vmatprep.subr.mxu0 0.0
    %1108 = vmatpush1.msra.mxu0 0.0
    %1109 = vmatprep.subr.mxu0 0.0
    %1110 = vmatpush1.msra.mxu0 0.0
    %1111 = vmatprep.subr.mxu0 0.0
    %1112 = vmatpush1.msra.mxu0 0.0
    %1113 = vmatprep.subr.mxu0 0.0
    %1114 = vmatpush1.msra.mxu0 0.0
    %1115 = vmatprep.subr.mxu0 0.0
    %1116 = vmatpush1.msra.mxu0 0.0
    %1117 = vmatprep.subr.mxu0 0.0
    %1118 = vmatpush1.msra.mxu0 0.0
    %1119 = vmatprep.subr.mxu0 0.0
    %1120 = vmatpush1.msra.mxu0 0.0
    %1121 = vmatprep.mubr.f32.mxu0 0.0
    %1122 = vmatmul.mubr.f32.gmra.mrb[0].mxu0 %v1055
    %v1123 = vpop.f32.mrb[0].mxu0
    %v1124 = vadd.f32 %v1042, %v1123
    %v1125 = vpop.f32.mrb[0].mxu0
    %1126 = vdwg.mxu0
    %v1127 = vld [vmem:[%s4] sm:$0x1]
    %v1129 = vlaneseq
    %v1130 = vshrl.u32 %v1129, 7
    %v1131 = vsub.s32 0, %v1130
    %v1132 = vrot.slane %v1127, %v1131
    %v1134 = vadd.f32 %v1124, %v1132
    %v1135 = vtanh.pop %v1134
    %vm1136 = vcmask 254976
    %1137 = vst.msk [vmem:[#allocation4] sm:$0x3] %vm1136, %v1135
    // Predicated region
    $region29: #{encoder_forward.3} parent=1 // pred_check
      _
    $region30: #{encoder_forward.3} parent=1 // pred_check_branch
      %1139 = sbr.rel (0) target = $region32
    $region31: #{encoder_forward.3} parent=1 // pred_region
      %s1141 = ssub.s32 512, 512
      %1142 = vsyncadd [#allocation3], %s1141
      %s1143 = sshll.u32 [#allocation2], 4
      %s1144 = int_to_ptr.vmem [resolvable:$true] %s1143
      %1149 = dma.vmem_to_hbm [thread:$0]  %s1144, 512, %s5, [#allocation3], 32, 32, 2
    $region32: #{encoder_forward.3} parent=1 // pred_fallthru
      _
    // Predicated region
    $region33: #{encoder_forward.3} parent=1 // pred_check
      _
    $region34: #{encoder_forward.3} parent=1 // pred_check_branch
      %1151 = sbr.rel (0) target = $region36
    $region35: #{encoder_forward.3} parent=1 // pred_region
      %s1153 = ssub.s32 32, 32
      %1154 = vsyncadd [#allocation5], %s1153
      %s1156 = sshll.u32 [#allocation4], 4
      %s1157 = int_to_ptr.vmem [resolvable:$true] %s1156
      %1159 = dma.vmem_to_hbm [thread:$0]  %s1157, 32, %s6, [#allocation5]
    $region36: #{encoder_forward.3} parent=1 // pred_fallthru
      _
    // Predicated region
    $region37: #{encoder_forward.3} parent=1 // pred_check
      _
    $region38: #{encoder_forward.3} parent=1 // pred_check_branch
      %1161 = sbr.rel (0) target = $region40
    $region39: #{encoder_forward.3} parent=1 // pred_region
      %1162 = dma.done [#allocation3], 512
    $region40: #{encoder_forward.3} parent=1 // pred_fallthru
      _
    // Predicated region
    $region41: #{encoder_forward.3} parent=1 // pred_check
      _
    $region42: #{encoder_forward.3} parent=1 // pred_check_branch
      %1164 = sbr.rel (0) target = $region44
    $region43: #{encoder_forward.3} parent=1 // pred_region
      %1165 = dma.done [#allocation5], 32
    $region44: #{encoder_forward.3} parent=1 // pred_fallthru
      _
    %1166 = vsyncpa [#allocation3], 1
    %1167 = vsyncpa [#allocation5], 1

</llo_original>
